<compile_context>
chip_gen: v6e
topology: v6e:2x2x1
jax: 0.10.0
libtpu: 0.0.40
codegen_flags: <defaults>
</compile_context>

<pallas_src>
import math
from functools import partial

import jax
import jax.numpy as jnp
from jax.experimental import pallas as pl
from jax.experimental.pallas import tpu as pltpu

LANE = 128


def _round_up(x, m):
    return (x + m - 1) // m * m


def decoder_kernel(z_ref, w4_ref, b4_ref, w5_ref, b5_ref, w6_ref, b6_ref, o_ref):
    # fc4 + ReLU  (bf16 matmul inputs, f32 accumulation + elementwise)
    z = z_ref[...].astype(jnp.bfloat16)
    h = jnp.dot(z, w4_ref[...], preferred_element_type=jnp.float32)
    h = jnp.maximum(h + b4_ref[...], 0.0)
    # fc5 + ReLU
    h = jnp.dot(h.astype(jnp.bfloat16), w5_ref[...],
                preferred_element_type=jnp.float32)
    h = jnp.maximum(h + b5_ref[...], 0.0)
    # fc6 + Sigmoid (output width padded to a multiple of 128 -> unmasked store)
    h = jnp.dot(h.astype(jnp.bfloat16), w6_ref[...],
                preferred_element_type=jnp.float32)
    h = h + b6_ref[...]
    o_ref[...] = jax.nn.sigmoid(h).astype(o_ref.dtype)


@partial(jax.jit, static_argnames=("tile_b",))
def decoder_forward(z, params, *, tile_b=256):
    """z: (B, latent_dim) float32 -> (B, input_dim) float32."""
    w4, b4, w5, b5, w6, b6 = params
    B, latent_dim = z.shape
    input_dim = w6.shape[1]
    out_pad = _round_up(input_dim, LANE)

    # Pad the last layer (and output) to a lane-dense width; zero columns are
    # sliced off after the kernel.
    if out_pad != input_dim:
        w6p = jnp.pad(w6, ((0, 0), (0, out_pad - input_dim)))
        b6p = jnp.pad(b6, ((0, 0), (0, out_pad - input_dim)))
    else:
        w6p, b6p = w6, b6

    # bf16 weights for the MXU; biases stay f32 (elementwise path).
    w4b = w4.astype(jnp.bfloat16)
    w5b = w5.astype(jnp.bfloat16)
    w6b = w6p.astype(jnp.bfloat16)

    if B >= 2 * tile_b and B % tile_b == 0:
        # Large-batch path: parallel grid over batch; weights stay resident
        # via constant index_maps (no re-DMA per tile).
        out = pl.pallas_call(
            decoder_kernel,
            out_shape=jax.ShapeDtypeStruct((B, out_pad), jnp.float32),
            grid=(B // tile_b,),
            in_specs=[
                pl.BlockSpec((tile_b, latent_dim), lambda i: (i, 0)),
                pl.BlockSpec(w4b.shape, lambda i: (0, 0)),
                pl.BlockSpec(b4.shape, lambda i: (0, 0)),
                pl.BlockSpec(w5b.shape, lambda i: (0, 0)),
                pl.BlockSpec(b5.shape, lambda i: (0, 0)),
                pl.BlockSpec(w6b.shape, lambda i: (0, 0)),
                pl.BlockSpec(b6p.shape, lambda i: (0, 0)),
            ],
            out_specs=pl.BlockSpec((tile_b, out_pad), lambda i: (i, 0)),
            compiler_params=pltpu.CompilerParams(
                dimension_semantics=("parallel",),
                vmem_limit_bytes=16 << 20,
            ),
        )(z, w4b, b4, w5b, b5, w6b, b6p)
    else:
        # Small-batch path: single gridless invocation; everything fits in
        # VMEM and per-grid-step overhead would dominate this ~µs kernel.
        full = pl.BlockSpec(memory_space=pltpu.VMEM)
        out = pl.pallas_call(
            decoder_kernel,
            out_shape=jax.ShapeDtypeStruct((B, out_pad), jnp.float32),
            in_specs=[full] * 7,
            out_specs=full,
            compiler_params=pltpu.CompilerParams(vmem_limit_bytes=16 << 20),
        )(z, w4b, b4, w5b, b5, w6b, b6p)

    return out[:, :input_dim] if out_pad != input_dim else out


def init_decoder_params(key, input_dim, latent_dim):
    """Deterministic init mirroring nn.Linear's U(-1/sqrt(fan_in), 1/sqrt(fan_in))."""
    dims = [(latent_dim, 256), (256, 512), (512, input_dim)]
    params = []
    keys = jax.random.split(key, 2 * len(dims))
    for i, (fan_in, fan_out) in enumerate(dims):
        bound = 1.0 / math.sqrt(fan_in)
        w = jax.random.uniform(
            keys[2 * i], (fan_in, fan_out), jnp.float32, -bound, bound
        )
        b = jax.random.uniform(
            keys[2 * i + 1], (1, fan_out), jnp.float32, -bound, bound
        )
        params += [w, b]
    return tuple(params)


def decoder_reference(z, params):
    w4, b4, w5, b5, w6, b6 = params
    h = jnp.maximum(z @ w4 + b4, 0.0)
    h = jnp.maximum(h @ w5 + b5, 0.0)
    return jax.nn.sigmoid(h @ w6 + b6)


if __name__ == "__main__":
    batch = 8
    latent_dim = 32
    input_dim = 784

    key = jax.random.PRNGKey(0)
    k_params, k_z = jax.random.split(key)
    params = init_decoder_params(k_params, input_dim, latent_dim)
    z = jax.random.normal(k_z, (batch, latent_dim), jnp.float32)

    out = jax.block_until_ready(decoder_forward(z, params))
    ref = jax.block_until_ready(decoder_reference(z, params))

    assert out.shape == (batch, input_dim)
    # bf16 matmul inputs -> loosen tolerance vs the f32 reference.
    assert jnp.allclose(out, ref, atol=2e-2, rtol=2e-2), float(
        jnp.max(jnp.abs(out - ref))
    )
    print("KERNEL_OK")
</pallas_src>

<mosaic_0001>
module attributes {stable_mosaic.version = 11 : i64} {
  func.func @decoder_kernel(%arg0: memref<8x32xf32, #tpu.memory_space<vmem>>, %arg1: memref<32x256xbf16, #tpu.memory_space<vmem>>, %arg2: memref<1x256xf32, #tpu.memory_space<vmem>>, %arg3: memref<256x512xbf16, #tpu.memory_space<vmem>>, %arg4: memref<1x512xf32, #tpu.memory_space<vmem>>, %arg5: memref<512x896xbf16, #tpu.memory_space<vmem>>, %arg6: memref<1x896xf32, #tpu.memory_space<vmem>>, %arg7: memref<8x896xf32, #tpu.memory_space<vmem>>) attributes {dimension_semantics = [], scalar_prefetch = 0 : i64, scratch_operands = 0 : i64, tpu.core_type = #tpu.core_type<tc>} {
    %c0 = arith.constant 0 : index
    %c0_0 = arith.constant 0 : index
    %0 = vector.load %arg0[%c0, %c0_0] : memref<8x32xf32, #tpu.memory_space<vmem>>, vector<8x32xf32>
    %1 = arith.truncf %0 : vector<8x32xf32> to vector<8x32xbf16>
    %c0_1 = arith.constant 0 : index
    %c0_2 = arith.constant 0 : index
    %2 = vector.load %arg1[%c0_1, %c0_2] : memref<32x256xbf16, #tpu.memory_space<vmem>>, vector<32x256xbf16>
    %cst = arith.constant dense<0.000000e+00> : vector<8x256xf32>
    %3 = tpu.matmul %1, %2, %cst {dimension_numbers = #tpu.dot_dimension_numbers<[1], [0], [0], [1], [0, 0, 1, 1], [], []>} : vector<8x32xbf16>, vector<32x256xbf16>, vector<8x256xf32> -> vector<8x256xf32>
    %c0_3 = arith.constant 0 : index
    %c0_4 = arith.constant 0 : index
    %4 = vector.load %arg2[%c0_3, %c0_4] : memref<1x256xf32, #tpu.memory_space<vmem>>, vector<1x256xf32>
    %5 = vector.broadcast %4 : vector<1x256xf32> to vector<8x256xf32>
    %6 = arith.addf %3, %5 : vector<8x256xf32>
    %cst_5 = arith.constant 0.000000e+00 : f32
    %7 = vector.broadcast %cst_5 : f32 to vector<8x256xf32>
    %8 = arith.maximumf %6, %7 : vector<8x256xf32>
    %9 = arith.truncf %8 : vector<8x256xf32> to vector<8x256xbf16>
    %c0_6 = arith.constant 0 : index
    %c0_7 = arith.constant 0 : index
    %10 = vector.load %arg3[%c0_6, %c0_7] : memref<256x512xbf16, #tpu.memory_space<vmem>>, vector<256x512xbf16>
    %cst_8 = arith.constant dense<0.000000e+00> : vector<8x512xf32>
    %11 = tpu.matmul %9, %10, %cst_8 {dimension_numbers = #tpu.dot_dimension_numbers<[1], [0], [0], [1], [0, 0, 1, 1], [], []>} : vector<8x256xbf16>, vector<256x512xbf16>, vector<8x512xf32> -> vector<8x512xf32>
    %c0_9 = arith.constant 0 : index
    %c0_10 = arith.constant 0 : index
    %12 = vector.load %arg4[%c0_9, %c0_10] : memref<1x512xf32, #tpu.memory_space<vmem>>, vector<1x512xf32>
    %13 = vector.broadcast %12 : vector<1x512xf32> to vector<8x512xf32>
    %14 = arith.addf %11, %13 : vector<8x512xf32>
    %cst_11 = arith.constant 0.000000e+00 : f32
    %15 = vector.broadcast %cst_11 : f32 to vector<8x512xf32>
    %16 = arith.maximumf %14, %15 : vector<8x512xf32>
    %17 = arith.truncf %16 : vector<8x512xf32> to vector<8x512xbf16>
    %c0_12 = arith.constant 0 : index
    %c0_13 = arith.constant 0 : index
    %18 = vector.load %arg5[%c0_12, %c0_13] : memref<512x896xbf16, #tpu.memory_space<vmem>>, vector<512x896xbf16>
    %cst_14 = arith.constant dense<0.000000e+00> : vector<8x896xf32>
    %19 = tpu.matmul %17, %18, %cst_14 {dimension_numbers = #tpu.dot_dimension_numbers<[1], [0], [0], [1], [0, 0, 1, 1], [], []>} : vector<8x512xbf16>, vector<512x896xbf16>, vector<8x896xf32> -> vector<8x896xf32>
    %c0_15 = arith.constant 0 : index
    %c0_16 = arith.constant 0 : index
    %20 = vector.load %arg6[%c0_15, %c0_16] : memref<1x896xf32, #tpu.memory_space<vmem>>, vector<1x896xf32>
    %21 = vector.broadcast %20 : vector<1x896xf32> to vector<8x896xf32>
    %22 = arith.addf %19, %21 : vector<8x896xf32>
    %23 = arith.negf %22 : vector<8x896xf32>
    %24 = math.exp %23 : vector<8x896xf32>
    %cst_17 = arith.constant 1.000000e+00 : f32
    %25 = vector.broadcast %cst_17 : f32 to vector<8x896xf32>
    %26 = arith.addf %25, %24 : vector<8x896xf32>
    %27 = arith.divf %25, %26 : vector<8x896xf32>
    %c0_18 = arith.constant 0 : index
    %c0_19 = arith.constant 0 : index
    %28 = vector.load %arg7[%c0_18, %c0_19] : memref<8x896xf32, #tpu.memory_space<vmem>>, vector<8x896xf32>
    tpu.vector_store %arg7[%c0_18, %c0_19], %27 {strides = array<i32>} : memref<8x896xf32, #tpu.memory_space<vmem>>, vector<8x896xf32>,
    return
  }
}

</mosaic_0001>

<llo_original>
// kernel: decoder_forward.1
$region0: #{decoder_forward.1}
  #allocation0 [shape = 'u32[]', space=smem, size = 0x4, offset = 0x4, fixed_abs, tag = 'smem constant byte address 0x4 - core index']
  #allocation1 [shape = 'u32[144,128]{1,0:T(1,128)}', space=vmem, size = 0x12000, scoped, tag = 'internal scratch']
  %s0 = inlined_call_operand.vmem [shape: f32[8,32], index: 0, kind: input, shape index: {}]
  %s1 = inlined_call_operand.vmem [shape: bf16[32,256], index: 1, kind: input, shape index: {}]
  %s2 = inlined_call_operand.vmem [shape: f32[1,256], index: 2, kind: input, shape index: {}]
  %s3 = inlined_call_operand.vmem [shape: bf16[256,512], index: 3, kind: input, shape index: {}]
  %s4 = inlined_call_operand.vmem [shape: f32[1,512], index: 4, kind: input, shape index: {}]
  %s5 = inlined_call_operand.vmem [shape: bf16[512,896], index: 5, kind: input, shape index: {}]
  %s6 = inlined_call_operand.vmem [shape: f32[1,896], index: 6, kind: input, shape index: {}]
  %s7 = inlined_call_operand.hbm [shape: f32[8,896], index: 7, kind: output, shape index: {}]
  %s8 = sld [smem:[#allocation0]]
  $region38: #{decoder_forward.1} parent=0
    _
  %s10 = ssub.s32 1, %s8
  %s11 = scalar_select 0, %s10, %s8
  $region1: #{decoder_forward.1} parent=0
    #allocation2 [shape = 'u8[28672]{0}', space=vmem, size = 0x7000, scoped, tag = 'output window, operand 0, single buffered']
    #allocation3 [shape = 's32[1]{0}', space=sflag, size = 0x4, scoped, tag = 'scoped memory for decoder_forward.1']
    %12 = vsyncpa [#allocation3], 0
    // Predicated region
    $region2: #{decoder_forward.1} parent=1 // pred_check
      _
    $region3: #{decoder_forward.1} parent=1 // pred_check_branch
      %14 = sbr.rel (0) target = $region5
    $region4: #{decoder_forward.1} parent=1 // pred_region
      _
    $region5: #{decoder_forward.1} parent=1 // pred_fallthru
      _
    // Predicated region
    $region6: #{decoder_forward.1} parent=1 // pred_check
      _
    $region7: #{decoder_forward.1} parent=1 // pred_check_branch
      %16 = sbr.rel (0) target = $region9
    $region8: #{decoder_forward.1} parent=1 // pred_region
      _
    $region9: #{decoder_forward.1} parent=1 // pred_fallthru
      _
    // Predicated region
    $region10: #{decoder_forward.1} parent=1 // pred_check
      _
    $region11: #{decoder_forward.1} parent=1 // pred_check_branch
      %18 = sbr.rel (0) target = $region13
    $region12: #{decoder_forward.1} parent=1 // pred_region
      _
    $region13: #{decoder_forward.1} parent=1 // pred_fallthru
      _
    // Predicated region
    $region14: #{decoder_forward.1} parent=1 // pred_check
      _
    $region15: #{decoder_forward.1} parent=1 // pred_check_branch
      %20 = sbr.rel (0) target = $region17
    $region16: #{decoder_forward.1} parent=1 // pred_region
      _
    $region17: #{decoder_forward.1} parent=1 // pred_fallthru
      _
    // Predicated region
    $region18: #{decoder_forward.1} parent=1 // pred_check
      _
    $region19: #{decoder_forward.1} parent=1 // pred_check_branch
      %22 = sbr.rel (0) target = $region21
    $region20: #{decoder_forward.1} parent=1 // pred_region
      _
    $region21: #{decoder_forward.1} parent=1 // pred_fallthru
      _
    // Predicated region
    $region22: #{decoder_forward.1} parent=1 // pred_check
      _
    $region23: #{decoder_forward.1} parent=1 // pred_check_branch
      %24 = sbr.rel (0) target = $region25
    $region24: #{decoder_forward.1} parent=1 // pred_region
      _
    $region25: #{decoder_forward.1} parent=1 // pred_fallthru
      _
    // Predicated region
    $region26: #{decoder_forward.1} parent=1 // pred_check
      _
    $region27: #{decoder_forward.1} parent=1 // pred_check_branch
      %26 = sbr.rel (0) target = $region29
    $region28: #{decoder_forward.1} parent=1 // pred_region
      _
    $region29: #{decoder_forward.1} parent=1 // pred_fallthru
      _
    %v28 = vld [vmem:[%s0] sm:$0xff]
    %v29 = vpack.c.bf16 %v28, %v28
    %v30 = vld [vmem:[%s1] sm:$0xff]
    %v31 = vld [vmem:[%s1 + $0x8] sm:$0xff]
    %v32 = vld [vmem:[%s1 + $0x10] sm:$0xff]
    %v33 = vld [vmem:[%s1 + $0x18] sm:$0xff]
    %v34 = vld [vmem:[%s2] sm:$0x3]
    %v36 = vlaneseq
    %v37 = vshrl.u32 %v36, 7
    %v38 = vsub.s32 0, %v37
    %v39 = vrot.slane %v34, %v38
    %v40 = vlaneseq
    %v41 = vshrl.u32 %v40, 7
    %v42 = vsub.s32 1, %v41
    %v43 = vrot.slane %v34, %v42
    %v50 = vunpack.c.l.b16 %v30
    %v51 = vunpack.c.h.b16 %v30
    %v52 = vunpack.c.l.b16 %v31
    %v53 = vunpack.c.h.b16 %v31
    %v54 = vunpack.c.l.b16 %v32
    %v55 = vunpack.c.h.b16 %v32
    %v56 = vunpack.c.l.b16 %v33
    %v57 = vunpack.c.h.b16 %v33
    %v58 = vpack.c.b16 %v52, %v50
    %v59 = vpack.c.b16 %v53, %v51
    %v60 = vpack.c.b16 %v56, %v54
    %v61 = vpack.c.b16 %v57, %v55
    %vm66 = vcmask 261120
    %v68 = vsel %vm66, %v29, 0
    %70 = vmatprep.subr.bf16.mxu0 0
    %71 = vmatpush1.bf16.msra.mxu0 0
    %72 = vmatprep.subr.bf16.mxu0 0
    %73 = vmatpush1.bf16.msra.mxu0 0
    %74 = vmatprep.subr.bf16.mxu0 0
    %75 = vmatpush1.bf16.msra.mxu0 0
    %76 = vmatprep.subr.bf16.mxu0 0
    %77 = vmatpush1.bf16.msra.mxu0 0
    %78 = vmatprep.subr.bf16.mxu0 0
    %79 = vmatpush1.bf16.msra.mxu0 0
    %80 = vmatprep.subr.bf16.mxu0 0
    %81 = vmatpush1.bf16.msra.mxu0 0
    %82 = vmatprep.subr.bf16.mxu0 %v61
    %83 = vmatpush1.bf16.msra.mxu0 %v60
    %84 = vmatprep.subr.bf16.mxu0 %v59
    %85 = vmatpush1.bf16.msra.mxu0 %v58
    %86 = vmatprep.subr.bf16.mxu0 0
    %87 = vmatpush2.bf16.msra.mxu0 0
    %88 = vmatprep.subr.bf16.mxu0 0
    %89 = vmatpush2.bf16.msra.mxu0 0
    %90 = vmatprep.subr.bf16.mxu0 0
    %91 = vmatpush2.bf16.msra.mxu0 0
    %92 = vmatprep.subr.bf16.mxu0 0
    %93 = vmatpush2.bf16.msra.mxu0 0
    %94 = vmatprep.subr.bf16.mxu0 0
    %95 = vmatpush2.bf16.msra.mxu0 0
    %96 = vmatprep.subr.bf16.mxu0 0
    %97 = vmatpush2.bf16.msra.mxu0 0
    %98 = vmatprep.subr.bf16.mxu0 0
    %99 = vmatpush2.bf16.msra.mxu0 0
    %100 = vmatprep.subr.bf16.mxu0 0
    %101 = vmatpush2.bf16.msra.mxu0 0
    %102 = vmatprep.mubr.bf16.mxu0 0
    %103 = vmatmul.mubr.bf16.gmra.mxu0 %v68
    %v104 = vpop.f32.mrf.mxu0
    %v105 = vadd.f32 %v39, %v104
    %v106 = vpop.f32.mrf.mxu0
    %v107 = vadd.f32 %v43, %v106
    %v108 = vpop.f32.mrf.mxu0
    %v109 = vpop.f32.mrf.mxu0
    %110 = vdwg.mxu0
    %v111 = vmax.f32 %v105, 0.0
    %v112 = vmax.f32 %v107, 0.0
    %v113 = vpack.c.bf16 %v111, %v111
    %v114 = vpack.c.bf16 %v112, %v112
    %v115 = vld [vmem:[%s3] sm:$0xff]
    %v116 = vld [vmem:[%s3 + $0x8] sm:$0xff]
    %v117 = vld [vmem:[%s3 + $0x10] sm:$0xff]
    %v118 = vld [vmem:[%s3 + $0x18] sm:$0xff]
    %v119 = vld [vmem:[%s3 + $0x20] sm:$0xff]
    %v120 = vld [vmem:[%s3 + $0x28] sm:$0xff]
    %v121 = vld [vmem:[%s3 + $0x30] sm:$0xff]
    %v122 = vld [vmem:[%s3 + $0x38] sm:$0xff]
    %v123 = vld [vmem:[%s3 + $0x40] sm:$0xff]
    %v124 = vld [vmem:[%s3 + $0x48] sm:$0xff]
    %v125 = vld [vmem:[%s3 + $0x50] sm:$0xff]
    %v126 = vld [vmem:[%s3 + $0x58] sm:$0xff]
    %v127 = vld [vmem:[%s3 + $0x60] sm:$0xff]
    %v128 = vld [vmem:[%s3 + $0x68] sm:$0xff]
    %v129 = vld [vmem:[%s3 + $0x70] sm:$0xff]
    %v130 = vld [vmem:[%s3 + $0x78] sm:$0xff]
    %v131 = vld [vmem:[%s3 + $0x80] sm:$0xff]
    %v132 = vld [vmem:[%s3 + $0x88] sm:$0xff]
    %v133 = vld [vmem:[%s3 + $0x90] sm:$0xff]
    %v134 = vld [vmem:[%s3 + $0x98] sm:$0xff]
    %v135 = vld [vmem:[%s3 + $0xa0] sm:$0xff]
    %v136 = vld [vmem:[%s3 + $0xa8] sm:$0xff]
    %v137 = vld [vmem:[%s3 + $0xb0] sm:$0xff]
    %v138 = vld [vmem:[%s3 + $0xb8] sm:$0xff]
    %v139 = vld [vmem:[%s3 + $0xc0] sm:$0xff]
    %v140 = vld [vmem:[%s3 + $0xc8] sm:$0xff]
    %v141 = vld [vmem:[%s3 + $0xd0] sm:$0xff]
    %v142 = vld [vmem:[%s3 + $0xd8] sm:$0xff]
    %v143 = vld [vmem:[%s3 + $0xe0] sm:$0xff]
    %v144 = vld [vmem:[%s3 + $0xe8] sm:$0xff]
    %v145 = vld [vmem:[%s3 + $0xf0] sm:$0xff]
    %v146 = vld [vmem:[%s3 + $0xf8] sm:$0xff]
    %v147 = vld [vmem:[%s3 + $0x100] sm:$0xff]
    %v148 = vld [vmem:[%s3 + $0x108] sm:$0xff]
    %v149 = vld [vmem:[%s3 + $0x110] sm:$0xff]
    %v150 = vld [vmem:[%s3 + $0x118] sm:$0xff]
    %v151 = vld [vmem:[%s3 + $0x120] sm:$0xff]
    %v152 = vld [vmem:[%s3 + $0x128] sm:$0xff]
    %v153 = vld [vmem:[%s3 + $0x130] sm:$0xff]
    %v154 = vld [vmem:[%s3 + $0x138] sm:$0xff]
    %v155 = vld [vmem:[%s3 + $0x140] sm:$0xff]
    %v156 = vld [vmem:[%s3 + $0x148] sm:$0xff]
    %v157 = vld [vmem:[%s3 + $0x150] sm:$0xff]
    %v158 = vld [vmem:[%s3 + $0x158] sm:$0xff]
    %v159 = vld [vmem:[%s3 + $0x160] sm:$0xff]
    %v160 = vld [vmem:[%s3 + $0x168] sm:$0xff]
    %v161 = vld [vmem:[%s3 + $0x170] sm:$0xff]
    %v162 = vld [vmem:[%s3 + $0x178] sm:$0xff]
    %v163 = vld [vmem:[%s3 + $0x180] sm:$0xff]
    %v164 = vld [vmem:[%s3 + $0x188] sm:$0xff]
    %v165 = vld [vmem:[%s3 + $0x190] sm:$0xff]
    %v166 = vld [vmem:[%s3 + $0x198] sm:$0xff]
    %v167 = vld [vmem:[%s3 + $0x1a0] sm:$0xff]
    %v168 = vld [vmem:[%s3 + $0x1a8] sm:$0xff]
    %v169 = vld [vmem:[%s3 + $0x1b0] sm:$0xff]
    %v170 = vld [vmem:[%s3 + $0x1b8] sm:$0xff]
    %v171 = vld [vmem:[%s3 + $0x1c0] sm:$0xff]
    %v172 = vld [vmem:[%s3 + $0x1c8] sm:$0xff]
    %v173 = vld [vmem:[%s3 + $0x1d0] sm:$0xff]
    %v174 = vld [vmem:[%s3 + $0x1d8] sm:$0xff]
    %v175 = vld [vmem:[%s3 + $0x1e0] sm:$0xff]
    %v176 = vld [vmem:[%s3 + $0x1e8] sm:$0xff]
    %v177 = vld [vmem:[%s3 + $0x1f0] sm:$0xff]
    %v178 = vld [vmem:[%s3 + $0x1f8] sm:$0xff]
    %v179 = vld [vmem:[%s4] sm:$0xf]
    %v181 = vlaneseq
    %v182 = vshrl.u32 %v181, 7
    %v183 = vsub.s32 0, %v182
    %v184 = vrot.slane %v179, %v183
    %v185 = vlaneseq
    %v186 = vshrl.u32 %v185, 7
    %v187 = vsub.s32 1, %v186
    %v188 = vrot.slane %v179, %v187
    %v189 = vlaneseq
    %v190 = vshrl.u32 %v189, 7
    %v191 = vsub.s32 2, %v190
    %v192 = vrot.slane %v179, %v191
    %v193 = vlaneseq
    %v194 = vshrl.u32 %v193, 7
    %v195 = vsub.s32 3, %v194
    %v196 = vrot.slane %v179, %v195
    %v265 = vunpack.c.l.b16 %v115
    %v266 = vunpack.c.h.b16 %v115
    %v267 = vunpack.c.l.b16 %v116
    %v268 = vunpack.c.h.b16 %v116
    %v269 = vunpack.c.l.b16 %v117
    %v270 = vunpack.c.h.b16 %v117
    %v271 = vunpack.c.l.b16 %v118
    %v272 = vunpack.c.h.b16 %v118
    %v273 = vunpack.c.l.b16 %v119
    %v274 = vunpack.c.h.b16 %v119
    %v275 = vunpack.c.l.b16 %v120
    %v276 = vunpack.c.h.b16 %v120
    %v277 = vunpack.c.l.b16 %v121
    %v278 = vunpack.c.h.b16 %v121
    %v279 = vunpack.c.l.b16 %v122
    %v280 = vunpack.c.h.b16 %v122
    %v281 = vunpack.c.l.b16 %v123
    %v282 = vunpack.c.h.b16 %v123
    %v283 = vunpack.c.l.b16 %v124
    %v284 = vunpack.c.h.b16 %v124
    %v285 = vunpack.c.l.b16 %v125
    %v286 = vunpack.c.h.b16 %v125
    %v287 = vunpack.c.l.b16 %v126
    %v288 = vunpack.c.h.b16 %v126
    %v289 = vunpack.c.l.b16 %v127
    %v290 = vunpack.c.h.b16 %v127
    %v291 = vunpack.c.l.b16 %v128
    %v292 = vunpack.c.h.b16 %v128
    %v293 = vunpack.c.l.b16 %v129
    %v294 = vunpack.c.h.b16 %v129
    %v295 = vunpack.c.l.b16 %v130
    %v296 = vunpack.c.h.b16 %v130
    %v297 = vunpack.c.l.b16 %v131
    %v298 = vunpack.c.h.b16 %v131
    %v299 = vunpack.c.l.b16 %v132
    %v300 = vunpack.c.h.b16 %v132
    %v301 = vunpack.c.l.b16 %v133
    %v302 = vunpack.c.h.b16 %v133
    %v303 = vunpack.c.l.b16 %v134
    %v304 = vunpack.c.h.b16 %v134
    %v305 = vunpack.c.l.b16 %v135
    %v306 = vunpack.c.h.b16 %v135
    %v307 = vunpack.c.l.b16 %v136
    %v308 = vunpack.c.h.b16 %v136
    %v309 = vunpack.c.l.b16 %v137
    %v310 = vunpack.c.h.b16 %v137
    %v311 = vunpack.c.l.b16 %v138
    %v312 = vunpack.c.h.b16 %v138
    %v313 = vunpack.c.l.b16 %v139
    %v314 = vunpack.c.h.b16 %v139
    %v315 = vunpack.c.l.b16 %v140
    %v316 = vunpack.c.h.b16 %v140
    %v317 = vunpack.c.l.b16 %v141
    %v318 = vunpack.c.h.b16 %v141
    %v319 = vunpack.c.l.b16 %v142
    %v320 = vunpack.c.h.b16 %v142
    %v321 = vunpack.c.l.b16 %v143
    %v322 = vunpack.c.h.b16 %v143
    %v323 = vunpack.c.l.b16 %v144
    %v324 = vunpack.c.h.b16 %v144
    %v325 = vunpack.c.l.b16 %v145
    %v326 = vunpack.c.h.b16 %v145
    %v327 = vunpack.c.l.b16 %v146
    %v328 = vunpack.c.h.b16 %v146
    %v329 = vunpack.c.l.b16 %v147
    %v330 = vunpack.c.h.b16 %v147
    %v331 = vunpack.c.l.b16 %v148
    %v332 = vunpack.c.h.b16 %v148
    %v333 = vunpack.c.l.b16 %v149
    %v334 = vunpack.c.h.b16 %v149
    %v335 = vunpack.c.l.b16 %v150
    %v336 = vunpack.c.h.b16 %v150
    %v337 = vunpack.c.l.b16 %v151
    %v338 = vunpack.c.h.b16 %v151
    %v339 = vunpack.c.l.b16 %v152
    %v340 = vunpack.c.h.b16 %v152
    %v341 = vunpack.c.l.b16 %v153
    %v342 = vunpack.c.h.b16 %v153
    %v343 = vunpack.c.l.b16 %v154
    %v344 = vunpack.c.h.b16 %v154
    %v345 = vunpack.c.l.b16 %v155
    %v346 = vunpack.c.h.b16 %v155
    %v347 = vunpack.c.l.b16 %v156
    %v348 = vunpack.c.h.b16 %v156
    %v349 = vunpack.c.l.b16 %v157
    %v350 = vunpack.c.h.b16 %v157
    %v351 = vunpack.c.l.b16 %v158
    %v352 = vunpack.c.h.b16 %v158
    %v353 = vunpack.c.l.b16 %v159
    %v354 = vunpack.c.h.b16 %v159
    %v355 = vunpack.c.l.b16 %v160
    %v356 = vunpack.c.h.b16 %v160
    %v357 = vunpack.c.l.b16 %v161
    %v358 = vunpack.c.h.b16 %v161
    %v359 = vunpack.c.l.b16 %v162
    %v360 = vunpack.c.h.b16 %v162
    %v361 = vunpack.c.l.b16 %v163
    %v362 = vunpack.c.h.b16 %v163
    %v363 = vunpack.c.l.b16 %v164
    %v364 = vunpack.c.h.b16 %v164
    %v365 = vunpack.c.l.b16 %v165
    %v366 = vunpack.c.h.b16 %v165
    %v367 = vunpack.c.l.b16 %v166
    %v368 = vunpack.c.h.b16 %v166
    %v369 = vunpack.c.l.b16 %v167
    %v370 = vunpack.c.h.b16 %v167
    %v371 = vunpack.c.l.b16 %v168
    %v372 = vunpack.c.h.b16 %v168
    %v373 = vunpack.c.l.b16 %v169
    %v374 = vunpack.c.h.b16 %v169
    %v375 = vunpack.c.l.b16 %v170
    %v376 = vunpack.c.h.b16 %v170
    %v377 = vunpack.c.l.b16 %v171
    %v378 = vunpack.c.h.b16 %v171
    %v379 = vunpack.c.l.b16 %v172
    %v380 = vunpack.c.h.b16 %v172
    %v381 = vunpack.c.l.b16 %v173
    %v382 = vunpack.c.h.b16 %v173
    %v383 = vunpack.c.l.b16 %v174
    %v384 = vunpack.c.h.b16 %v174
    %v385 = vunpack.c.l.b16 %v175
    %v386 = vunpack.c.h.b16 %v175
    %v387 = vunpack.c.l.b16 %v176
    %v388 = vunpack.c.h.b16 %v176
    %v389 = vunpack.c.l.b16 %v177
    %v390 = vunpack.c.h.b16 %v177
    %v391 = vunpack.c.l.b16 %v178
    %v392 = vunpack.c.h.b16 %v178
    %v393 = vpack.c.b16 %v269, %v265
    %v394 = vpack.c.b16 %v270, %v266
    %v395 = vpack.c.b16 %v271, %v267
    %v396 = vpack.c.b16 %v272, %v268
    %v397 = vpack.c.b16 %v277, %v273
    %v398 = vpack.c.b16 %v278, %v274
    %v399 = vpack.c.b16 %v279, %v275
    %v400 = vpack.c.b16 %v280, %v276
    %v401 = vpack.c.b16 %v285, %v281
    %v402 = vpack.c.b16 %v286, %v282
    %v403 = vpack.c.b16 %v287, %v283
    %v404 = vpack.c.b16 %v288, %v284
    %v405 = vpack.c.b16 %v293, %v289
    %v406 = vpack.c.b16 %v294, %v290
    %v407 = vpack.c.b16 %v295, %v291
    %v408 = vpack.c.b16 %v296, %v292
    %v409 = vpack.c.b16 %v301, %v297
    %v410 = vpack.c.b16 %v302, %v298
    %v411 = vpack.c.b16 %v303, %v299
    %v412 = vpack.c.b16 %v304, %v300
    %v413 = vpack.c.b16 %v309, %v305
    %v414 = vpack.c.b16 %v310, %v306
    %v415 = vpack.c.b16 %v311, %v307
    %v416 = vpack.c.b16 %v312, %v308
    %v417 = vpack.c.b16 %v317, %v313
    %v418 = vpack.c.b16 %v318, %v314
    %v419 = vpack.c.b16 %v319, %v315
    %v420 = vpack.c.b16 %v320, %v316
    %v421 = vpack.c.b16 %v325, %v321
    %v422 = vpack.c.b16 %v326, %v322
    %v423 = vpack.c.b16 %v327, %v323
    %v424 = vpack.c.b16 %v328, %v324
    %v425 = vpack.c.b16 %v333, %v329
    %v426 = vpack.c.b16 %v334, %v330
    %v427 = vpack.c.b16 %v335, %v331
    %v428 = vpack.c.b16 %v336, %v332
    %v429 = vpack.c.b16 %v341, %v337
    %v430 = vpack.c.b16 %v342, %v338
    %v431 = vpack.c.b16 %v343, %v339
    %v432 = vpack.c.b16 %v344, %v340
    %v433 = vpack.c.b16 %v349, %v345
    %v434 = vpack.c.b16 %v350, %v346
    %v435 = vpack.c.b16 %v351, %v347
    %v436 = vpack.c.b16 %v352, %v348
    %v437 = vpack.c.b16 %v357, %v353
    %v438 = vpack.c.b16 %v358, %v354
    %v439 = vpack.c.b16 %v359, %v355
    %v440 = vpack.c.b16 %v360, %v356
    %v441 = vpack.c.b16 %v365, %v361
    %v442 = vpack.c.b16 %v366, %v362
    %v443 = vpack.c.b16 %v367, %v363
    %v444 = vpack.c.b16 %v368, %v364
    %v445 = vpack.c.b16 %v373, %v369
    %v446 = vpack.c.b16 %v374, %v370
    %v447 = vpack.c.b16 %v375, %v371
    %v448 = vpack.c.b16 %v376, %v372
    %v449 = vpack.c.b16 %v381, %v377
    %v450 = vpack.c.b16 %v382, %v378
    %v451 = vpack.c.b16 %v383, %v379
    %v452 = vpack.c.b16 %v384, %v380
    %v453 = vpack.c.b16 %v389, %v385
    %v454 = vpack.c.b16 %v390, %v386
    %v455 = vpack.c.b16 %v391, %v387
    %v456 = vpack.c.b16 %v392, %v388
    %521 = vmatprep.subr.bf16.mxu0 %v422
    %522 = vmatpush1.bf16.msra.mxu0 %v421
    %523 = vmatprep.subr.bf16.mxu0 %v418
    %524 = vmatpush1.bf16.msra.mxu0 %v417
    %525 = vmatprep.subr.bf16.mxu0 %v414
    %526 = vmatpush1.bf16.msra.mxu0 %v413
    %527 = vmatprep.subr.bf16.mxu0 %v410
    %528 = vmatpush1.bf16.msra.mxu0 %v409
    %529 = vmatprep.subr.bf16.mxu0 %v406
    %530 = vmatpush1.bf16.msra.mxu0 %v405
    %531 = vmatprep.subr.bf16.mxu0 %v402
    %532 = vmatpush1.bf16.msra.mxu0 %v401
    %533 = vmatprep.subr.bf16.mxu0 %v398
    %534 = vmatpush1.bf16.msra.mxu0 %v397
    %535 = vmatprep.subr.bf16.mxu0 %v394
    %536 = vmatpush1.bf16.msra.mxu0 %v393
    %537 = vmatprep.subr.bf16.mxu0 %v454
    %538 = vmatpush2.bf16.msra.mxu0 %v453
    %539 = vmatprep.subr.bf16.mxu0 %v450
    %540 = vmatpush2.bf16.msra.mxu0 %v449
    %541 = vmatprep.subr.bf16.mxu0 %v446
    %542 = vmatpush2.bf16.msra.mxu0 %v445
    %543 = vmatprep.subr.bf16.mxu0 %v442
    %544 = vmatpush2.bf16.msra.mxu0 %v441
    %545 = vmatprep.subr.bf16.mxu0 %v438
    %546 = vmatpush2.bf16.msra.mxu0 %v437
    %547 = vmatprep.subr.bf16.mxu0 %v434
    %548 = vmatpush2.bf16.msra.mxu0 %v433
    %549 = vmatprep.subr.bf16.mxu0 %v430
    %550 = vmatpush2.bf16.msra.mxu0 %v429
    %551 = vmatprep.subr.bf16.mxu0 %v426
    %552 = vmatpush2.bf16.msra.mxu0 %v425
    %553 = vmatprep.mubr.bf16.mxu0 %v114
    %554 = vmatmul.mubr.bf16.gmra.mxu0 %v113
    %v555 = vpop.f32.mrf.mxu0
    %v556 = vadd.f32 %v184, %v555
    %v557 = vpop.f32.mrf.mxu0
    %v558 = vadd.f32 %v188, %v557
    %v559 = vpop.f32.mrf.mxu0
    %v560 = vpop.f32.mrf.mxu0
    %561 = vdwg.mxu0
    %562 = vmatprep.subr.bf16.mxu0 %v424
    %563 = vmatpush1.bf16.msra.mxu0 %v423
    %564 = vmatprep.subr.bf16.mxu0 %v420
    %565 = vmatpush1.bf16.msra.mxu0 %v419
    %566 = vmatprep.subr.bf16.mxu0 %v416
    %567 = vmatpush1.bf16.msra.mxu0 %v415
    %568 = vmatprep.subr.bf16.mxu0 %v412
    %569 = vmatpush1.bf16.msra.mxu0 %v411
    %570 = vmatprep.subr.bf16.mxu0 %v408
    %571 = vmatpush1.bf16.msra.mxu0 %v407
    %572 = vmatprep.subr.bf16.mxu0 %v404
    %573 = vmatpush1.bf16.msra.mxu0 %v403
    %574 = vmatprep.subr.bf16.mxu0 %v400
    %575 = vmatpush1.bf16.msra.mxu0 %v399
    %576 = vmatprep.subr.bf16.mxu0 %v396
    %577 = vmatpush1.bf16.msra.mxu0 %v395
    %578 = vmatprep.subr.bf16.mxu0 %v456
    %579 = vmatpush2.bf16.msra.mxu0 %v455
    %580 = vmatprep.subr.bf16.mxu0 %v452
    %581 = vmatpush2.bf16.msra.mxu0 %v451
    %582 = vmatprep.subr.bf16.mxu0 %v448
    %583 = vmatpush2.bf16.msra.mxu0 %v447
    %584 = vmatprep.subr.bf16.mxu0 %v444
    %585 = vmatpush2.bf16.msra.mxu0 %v443
    %586 = vmatprep.subr.bf16.mxu0 %v440
    %587 = vmatpush2.bf16.msra.mxu0 %v439
    %588 = vmatprep.subr.bf16.mxu0 %v436
    %589 = vmatpush2.bf16.msra.mxu0 %v435
    %590 = vmatprep.subr.bf16.mxu0 %v432
    %591 = vmatpush2.bf16.msra.mxu0 %v431
    %592 = vmatprep.subr.bf16.mxu0 %v428
    %593 = vmatpush2.bf16.msra.mxu0 %v427
    %594 = vmatprep.mubr.bf16.mxu0 %v114
    %595 = vmatmul.mubr.bf16.gmra.mxu0 %v113
    %v596 = vpop.f32.mrf.mxu0
    %v597 = vadd.f32 %v192, %v596
    %v598 = vpop.f32.mrf.mxu0
    %v599 = vadd.f32 %v196, %v598
    %v600 = vpop.f32.mrf.mxu0
    %v601 = vpop.f32.mrf.mxu0
    %602 = vdwg.mxu0
    %v603 = vmax.f32 %v556, 0.0
    %v604 = vmax.f32 %v558, 0.0
    %v605 = vmax.f32 %v597, 0.0
    %v606 = vmax.f32 %v599, 0.0
    %v607 = vpack.c.bf16 %v603, %v603
    %v608 = vpack.c.bf16 %v604, %v604
    %v609 = vpack.c.bf16 %v605, %v605
    %v610 = vpack.c.bf16 %v606, %v606
    %v611 = vld [vmem:[%s5] sm:$0xff]
    %v612 = vld [vmem:[%s5 + $0x8] sm:$0xff]
    %v613 = vld [vmem:[%s5 + $0x10] sm:$0xff]
    %v614 = vld [vmem:[%s5 + $0x18] sm:$0xf]
    %v615 = vld [vmem:[%s5 + $0x1c] sm:$0xff]
    %v616 = vld [vmem:[%s5 + $0x24] sm:$0xff]
    %v617 = vld [vmem:[%s5 + $0x2c] sm:$0xff]
    %v618 = vld [vmem:[%s5 + $0x34] sm:$0xf]
    %v619 = vld [vmem:[%s5 + $0x38] sm:$0xff]
    %v620 = vld [vmem:[%s5 + $0x40] sm:$0xff]
    %v621 = vld [vmem:[%s5 + $0x48] sm:$0xff]
    %v622 = vld [vmem:[%s5 + $0x50] sm:$0xf]
    %v623 = vld [vmem:[%s5 + $0x54] sm:$0xff]
    %v624 = vld [vmem:[%s5 + $0x5c] sm:$0xff]
    %v625 = vld [vmem:[%s5 + $0x64] sm:$0xff]
    %v626 = vld [vmem:[%s5 + $0x6c] sm:$0xf]
    %v627 = vld [vmem:[%s5 + $0x70] sm:$0xff]
    %v628 = vld [vmem:[%s5 + $0x78] sm:$0xff]
    %v629 = vld [vmem:[%s5 + $0x80] sm:$0xff]
    %v630 = vld [vmem:[%s5 + $0x88] sm:$0xf]
    %v631 = vld [vmem:[%s5 + $0x8c] sm:$0xff]
    %v632 = vld [vmem:[%s5 + $0x94] sm:$0xff]
    %v633 = vld [vmem:[%s5 + $0x9c] sm:$0xff]
    %v634 = vld [vmem:[%s5 + $0xa4] sm:$0xf]
    %v635 = vld [vmem:[%s5 + $0xa8] sm:$0xff]
    %v636 = vld [vmem:[%s5 + $0xb0] sm:$0xff]
    %v637 = vld [vmem:[%s5 + $0xb8] sm:$0xff]
    %v638 = vld [vmem:[%s5 + $0xc0] sm:$0xf]
    %v639 = vld [vmem:[%s5 + $0xc4] sm:$0xff]
    %v640 = vld [vmem:[%s5 + $0xcc] sm:$0xff]
    %v641 = vld [vmem:[%s5 + $0xd4] sm:$0xff]
    %v642 = vld [vmem:[%s5 + $0xdc] sm:$0xf]
    %v643 = vld [vmem:[%s5 + $0xe0] sm:$0xff]
    %v644 = vld [vmem:[%s5 + $0xe8] sm:$0xff]
    %v645 = vld [vmem:[%s5 + $0xf0] sm:$0xff]
    %v646 = vld [vmem:[%s5 + $0xf8] sm:$0xf]
    %v647 = vld [vmem:[%s5 + $0xfc] sm:$0xff]
    %v648 = vld [vmem:[%s5 + $0x104] sm:$0xff]
    %v649 = vld [vmem:[%s5 + $0x10c] sm:$0xff]
    %v650 = vld [vmem:[%s5 + $0x114] sm:$0xf]
    %v651 = vld [vmem:[%s5 + $0x118] sm:$0xff]
    %v652 = vld [vmem:[%s5 + $0x120] sm:$0xff]
    %v653 = vld [vmem:[%s5 + $0x128] sm:$0xff]
    %v654 = vld [vmem:[%s5 + $0x130] sm:$0xf]
    %v655 = vld [vmem:[%s5 + $0x134] sm:$0xff]
    %v656 = vld [vmem:[%s5 + $0x13c] sm:$0xff]
    %v657 = vld [vmem:[%s5 + $0x144] sm:$0xff]
    %v658 = vld [vmem:[%s5 + $0x14c] sm:$0xf]
    %v659 = vld [vmem:[%s5 + $0x150] sm:$0xff]
    %v660 = vld [vmem:[%s5 + $0x158] sm:$0xff]
    %v661 = vld [vmem:[%s5 + $0x160] sm:$0xff]
    %v662 = vld [vmem:[%s5 + $0x168] sm:$0xf]
    %v663 = vld [vmem:[%s5 + $0x16c] sm:$0xff]
    %v664 = vld [vmem:[%s5 + $0x174] sm:$0xff]
    %v665 = vld [vmem:[%s5 + $0x17c] sm:$0xff]
    %v666 = vld [vmem:[%s5 + $0x184] sm:$0xf]
    %v667 = vld [vmem:[%s5 + $0x188] sm:$0xff]
    %v668 = vld [vmem:[%s5 + $0x190] sm:$0xff]
    %v669 = vld [vmem:[%s5 + $0x198] sm:$0xff]
    %v670 = vld [vmem:[%s5 + $0x1a0] sm:$0xf]
    %v671 = vld [vmem:[%s5 + $0x1a4] sm:$0xff]
    %v672 = vld [vmem:[%s5 + $0x1ac] sm:$0xff]
    %v673 = vld [vmem:[%s5 + $0x1b4] sm:$0xff]
    %v674 = vld [vmem:[%s5 + $0x1bc] sm:$0xf]
    %v675 = vld [vmem:[%s5 + $0x1c0] sm:$0xff]
    %v676 = vld [vmem:[%s5 + $0x1c8] sm:$0xff]
    %v677 = vld [vmem:[%s5 + $0x1d0] sm:$0xff]
    %v678 = vld [vmem:[%s5 + $0x1d8] sm:$0xf]
    %v679 = vld [vmem:[%s5 + $0x1dc] sm:$0xff]
    %v680 = vld [vmem:[%s5 + $0x1e4] sm:$0xff]
    %v681 = vld [vmem:[%s5 + $0x1ec] sm:$0xff]
    %v682 = vld [vmem:[%s5 + $0x1f4] sm:$0xf]
    %v683 = vld [vmem:[%s5 + $0x1f8] sm:$0xff]
    %v684 = vld [vmem:[%s5 + $0x200] sm:$0xff]
    %v685 = vld [vmem:[%s5 + $0x208] sm:$0xff]
    %v686 = vld [vmem:[%s5 + $0x210] sm:$0xf]
    %v687 = vld [vmem:[%s5 + $0x214] sm:$0xff]
    %v688 = vld [vmem:[%s5 + $0x21c] sm:$0xff]
    %v689 = vld [vmem:[%s5 + $0x224] sm:$0xff]
    %v690 = vld [vmem:[%s5 + $0x22c] sm:$0xf]
    %v691 = vld [vmem:[%s5 + $0x230] sm:$0xff]
    %v692 = vld [vmem:[%s5 + $0x238] sm:$0xff]
    %v693 = vld [vmem:[%s5 + $0x240] sm:$0xff]
    %v694 = vld [vmem:[%s5 + $0x248] sm:$0xf]
    %v695 = vld [vmem:[%s5 + $0x24c] sm:$0xff]
    %v696 = vld [vmem:[%s5 + $0x254] sm:$0xff]
    %v697 = vld [vmem:[%s5 + $0x25c] sm:$0xff]
    %v698 = vld [vmem:[%s5 + $0x264] sm:$0xf]
    %v699 = vld [vmem:[%s5 + $0x268] sm:$0xff]
    %v700 = vld [vmem:[%s5 + $0x270] sm:$0xff]
    %v701 = vld [vmem:[%s5 + $0x278] sm:$0xff]
    %v702 = vld [vmem:[%s5 + $0x280] sm:$0xf]
    %v703 = vld [vmem:[%s5 + $0x284] sm:$0xff]
    %v704 = vld [vmem:[%s5 + $0x28c] sm:$0xff]
    %v705 = vld [vmem:[%s5 + $0x294] sm:$0xff]
    %v706 = vld [vmem:[%s5 + $0x29c] sm:$0xf]
    %v707 = vld [vmem:[%s5 + $0x2a0] sm:$0xff]
    %v708 = vld [vmem:[%s5 + $0x2a8] sm:$0xff]
    %v709 = vld [vmem:[%s5 + $0x2b0] sm:$0xff]
    %v710 = vld [vmem:[%s5 + $0x2b8] sm:$0xf]
    %v711 = vld [vmem:[%s5 + $0x2bc] sm:$0xff]
    %v712 = vld [vmem:[%s5 + $0x2c4] sm:$0xff]
    %v713 = vld [vmem:[%s5 + $0x2cc] sm:$0xff]
    %v714 = vld [vmem:[%s5 + $0x2d4] sm:$0xf]
    %v715 = vld [vmem:[%s5 + $0x2d8] sm:$0xff]
    %v716 = vld [vmem:[%s5 + $0x2e0] sm:$0xff]
    %v717 = vld [vmem:[%s5 + $0x2e8] sm:$0xff]
    %v718 = vld [vmem:[%s5 + $0x2f0] sm:$0xf]
    %v719 = vld [vmem:[%s5 + $0x2f4] sm:$0xff]
    %v720 = vld [vmem:[%s5 + $0x2fc] sm:$0xff]
    %v721 = vld [vmem:[%s5 + $0x304] sm:$0xff]
    %v722 = vld [vmem:[%s5 + $0x30c] sm:$0xf]
    %v723 = vld [vmem:[%s5 + $0x310] sm:$0xff]
    %v724 = vld [vmem:[%s5 + $0x318] sm:$0xff]
    %v725 = vld [vmem:[%s5 + $0x320] sm:$0xff]
    %v726 = vld [vmem:[%s5 + $0x328] sm:$0xf]
    %v727 = vld [vmem:[%s5 + $0x32c] sm:$0xff]
    %v728 = vld [vmem:[%s5 + $0x334] sm:$0xff]
    %v729 = vld [vmem:[%s5 + $0x33c] sm:$0xff]
    %v730 = vld [vmem:[%s5 + $0x344] sm:$0xf]
    %v731 = vld [vmem:[%s5 + $0x348] sm:$0xff]
    %v732 = vld [vmem:[%s5 + $0x350] sm:$0xff]
    %v733 = vld [vmem:[%s5 + $0x358] sm:$0xff]
    %v734 = vld [vmem:[%s5 + $0x360] sm:$0xf]
    %v735 = vld [vmem:[%s5 + $0x364] sm:$0xff]
    %v736 = vld [vmem:[%s5 + $0x36c] sm:$0xff]
    %v737 = vld [vmem:[%s5 + $0x374] sm:$0xff]
    %v738 = vld [vmem:[%s5 + $0x37c] sm:$0xf]
    %v739 = vld [vmem:[%s5 + $0x380] sm:$0xff]
    %v740 = vld [vmem:[%s5 + $0x388] sm:$0xff]
    %v741 = vld [vmem:[%s5 + $0x390] sm:$0xff]
    %v742 = vld [vmem:[%s5 + $0x398] sm:$0xf]
    %v743 = vld [vmem:[%s5 + $0x39c] sm:$0xff]
    %v744 = vld [vmem:[%s5 + $0x3a4] sm:$0xff]
    %v745 = vld [vmem:[%s5 + $0x3ac] sm:$0xff]
    %v746 = vld [vmem:[%s5 + $0x3b4] sm:$0xf]
    %v747 = vld [vmem:[%s5 + $0x3b8] sm:$0xff]
    %v748 = vld [vmem:[%s5 + $0x3c0] sm:$0xff]
    %v749 = vld [vmem:[%s5 + $0x3c8] sm:$0xff]
    %v750 = vld [vmem:[%s5 + $0x3d0] sm:$0xf]
    %v751 = vld [vmem:[%s5 + $0x3d4] sm:$0xff]
    %v752 = vld [vmem:[%s5 + $0x3dc] sm:$0xff]
    %v753 = vld [vmem:[%s5 + $0x3e4] sm:$0xff]
    %v754 = vld [vmem:[%s5 + $0x3ec] sm:$0xf]
    %v755 = vld [vmem:[%s5 + $0x3f0] sm:$0xff]
    %v756 = vld [vmem:[%s5 + $0x3f8] sm:$0xff]
    %v757 = vld [vmem:[%s5 + $0x400] sm:$0xff]
    %v758 = vld [vmem:[%s5 + $0x408] sm:$0xf]
    %v759 = vld [vmem:[%s5 + $0x40c] sm:$0xff]
    %v760 = vld [vmem:[%s5 + $0x414] sm:$0xff]
    %v761 = vld [vmem:[%s5 + $0x41c] sm:$0xff]
    %v762 = vld [vmem:[%s5 + $0x424] sm:$0xf]
    %v763 = vld [vmem:[%s5 + $0x428] sm:$0xff]
    %v764 = vld [vmem:[%s5 + $0x430] sm:$0xff]
    %v765 = vld [vmem:[%s5 + $0x438] sm:$0xff]
    %v766 = vld [vmem:[%s5 + $0x440] sm:$0xf]
    %v767 = vld [vmem:[%s5 + $0x444] sm:$0xff]
    %v768 = vld [vmem:[%s5 + $0x44c] sm:$0xff]
    %v769 = vld [vmem:[%s5 + $0x454] sm:$0xff]
    %v770 = vld [vmem:[%s5 + $0x45c] sm:$0xf]
    %v771 = vld [vmem:[%s5 + $0x460] sm:$0xff]
    %v772 = vld [vmem:[%s5 + $0x468] sm:$0xff]
    %v773 = vld [vmem:[%s5 + $0x470] sm:$0xff]
    %v774 = vld [vmem:[%s5 + $0x478] sm:$0xf]
    %v775 = vld [vmem:[%s5 + $0x47c] sm:$0xff]
    %v776 = vld [vmem:[%s5 + $0x484] sm:$0xff]
    %v777 = vld [vmem:[%s5 + $0x48c] sm:$0xff]
    %v778 = vld [vmem:[%s5 + $0x494] sm:$0xf]
    %v779 = vld [vmem:[%s5 + $0x498] sm:$0xff]
    %v780 = vld [vmem:[%s5 + $0x4a0] sm:$0xff]
    %v781 = vld [vmem:[%s5 + $0x4a8] sm:$0xff]
    %v782 = vld [vmem:[%s5 + $0x4b0] sm:$0xf]
    %v783 = vld [vmem:[%s5 + $0x4b4] sm:$0xff]
    %v784 = vld [vmem:[%s5 + $0x4bc] sm:$0xff]
    %v785 = vld [vmem:[%s5 + $0x4c4] sm:$0xff]
    %v786 = vld [vmem:[%s5 + $0x4cc] sm:$0xf]
    %v787 = vld [vmem:[%s5 + $0x4d0] sm:$0xff]
    %v788 = vld [vmem:[%s5 + $0x4d8] sm:$0xff]
    %v789 = vld [vmem:[%s5 + $0x4e0] sm:$0xff]
    %v790 = vld [vmem:[%s5 + $0x4e8] sm:$0xf]
    %v791 = vld [vmem:[%s5 + $0x4ec] sm:$0xff]
    %v792 = vld [vmem:[%s5 + $0x4f4] sm:$0xff]
    %v793 = vld [vmem:[%s5 + $0x4fc] sm:$0xff]
    %v794 = vld [vmem:[%s5 + $0x504] sm:$0xf]
    %v795 = vld [vmem:[%s5 + $0x508] sm:$0xff]
    %v796 = vld [vmem:[%s5 + $0x510] sm:$0xff]
    %v797 = vld [vmem:[%s5 + $0x518] sm:$0xff]
    %v798 = vld [vmem:[%s5 + $0x520] sm:$0xf]
    %v799 = vld [vmem:[%s5 + $0x524] sm:$0xff]
    %v800 = vld [vmem:[%s5 + $0x52c] sm:$0xff]
    %v801 = vld [vmem:[%s5 + $0x534] sm:$0xff]
    %v802 = vld [vmem:[%s5 + $0x53c] sm:$0xf]
    %v803 = vld [vmem:[%s5 + $0x540] sm:$0xff]
    %v804 = vld [vmem:[%s5 + $0x548] sm:$0xff]
    %v805 = vld [vmem:[%s5 + $0x550] sm:$0xff]
    %v806 = vld [vmem:[%s5 + $0x558] sm:$0xf]
    %v807 = vld [vmem:[%s5 + $0x55c] sm:$0xff]
    %v808 = vld [vmem:[%s5 + $0x564] sm:$0xff]
    %v809 = vld [vmem:[%s5 + $0x56c] sm:$0xff]
    %v810 = vld [vmem:[%s5 + $0x574] sm:$0xf]
    %v811 = vld [vmem:[%s5 + $0x578] sm:$0xff]
    %v812 = vld [vmem:[%s5 + $0x580] sm:$0xff]
    %v813 = vld [vmem:[%s5 + $0x588] sm:$0xff]
    %v814 = vld [vmem:[%s5 + $0x590] sm:$0xf]
    %v815 = vld [vmem:[%s5 + $0x594] sm:$0xff]
    %v816 = vld [vmem:[%s5 + $0x59c] sm:$0xff]
    %v817 = vld [vmem:[%s5 + $0x5a4] sm:$0xff]
    %v818 = vld [vmem:[%s5 + $0x5ac] sm:$0xf]
    %v819 = vld [vmem:[%s5 + $0x5b0] sm:$0xff]
    %v820 = vld [vmem:[%s5 + $0x5b8] sm:$0xff]
    %v821 = vld [vmem:[%s5 + $0x5c0] sm:$0xff]
    %v822 = vld [vmem:[%s5 + $0x5c8] sm:$0xf]
    %v823 = vld [vmem:[%s5 + $0x5cc] sm:$0xff]
    %v824 = vld [vmem:[%s5 + $0x5d4] sm:$0xff]
    %v825 = vld [vmem:[%s5 + $0x5dc] sm:$0xff]
    %v826 = vld [vmem:[%s5 + $0x5e4] sm:$0xf]
    %v827 = vld [vmem:[%s5 + $0x5e8] sm:$0xff]
    %v828 = vld [vmem:[%s5 + $0x5f0] sm:$0xff]
    %v829 = vld [vmem:[%s5 + $0x5f8] sm:$0xff]
    %v830 = vld [vmem:[%s5 + $0x600] sm:$0xf]
    %v831 = vld [vmem:[%s5 + $0x604] sm:$0xff]
    %v832 = vld [vmem:[%s5 + $0x60c] sm:$0xff]
    %v833 = vld [vmem:[%s5 + $0x614] sm:$0xff]
    %v834 = vld [vmem:[%s5 + $0x61c] sm:$0xf]
    %v835 = vld [vmem:[%s5 + $0x620] sm:$0xff]
    %v836 = vld [vmem:[%s5 + $0x628] sm:$0xff]
    %v837 = vld [vmem:[%s5 + $0x630] sm:$0xff]
    %v838 = vld [vmem:[%s5 + $0x638] sm:$0xf]
    %v839 = vld [vmem:[%s5 + $0x63c] sm:$0xff]
    %v840 = vld [vmem:[%s5 + $0x644] sm:$0xff]
    %v841 = vld [vmem:[%s5 + $0x64c] sm:$0xff]
    %v842 = vld [vmem:[%s5 + $0x654] sm:$0xf]
    %v843 = vld [vmem:[%s5 + $0x658] sm:$0xff]
    %v844 = vld [vmem:[%s5 + $0x660] sm:$0xff]
    %v845 = vld [vmem:[%s5 + $0x668] sm:$0xff]
    %v846 = vld [vmem:[%s5 + $0x670] sm:$0xf]
    %v847 = vld [vmem:[%s5 + $0x674] sm:$0xff]
    %v848 = vld [vmem:[%s5 + $0x67c] sm:$0xff]
    %v849 = vld [vmem:[%s5 + $0x684] sm:$0xff]
    %v850 = vld [vmem:[%s5 + $0x68c] sm:$0xf]
    %v851 = vld [vmem:[%s5 + $0x690] sm:$0xff]
    %v852 = vld [vmem:[%s5 + $0x698] sm:$0xff]
    %v853 = vld [vmem:[%s5 + $0x6a0] sm:$0xff]
    %v854 = vld [vmem:[%s5 + $0x6a8] sm:$0xf]
    %v855 = vld [vmem:[%s5 + $0x6ac] sm:$0xff]
    %v856 = vld [vmem:[%s5 + $0x6b4] sm:$0xff]
    %v857 = vld [vmem:[%s5 + $0x6bc] sm:$0xff]
    %v858 = vld [vmem:[%s5 + $0x6c4] sm:$0xf]
    %v859 = vld [vmem:[%s5 + $0x6c8] sm:$0xff]
    %v860 = vld [vmem:[%s5 + $0x6d0] sm:$0xff]
    %v861 = vld [vmem:[%s5 + $0x6d8] sm:$0xff]
    %v862 = vld [vmem:[%s5 + $0x6e0] sm:$0xf]
    %v863 = vld [vmem:[%s5 + $0x6e4] sm:$0xff]
    %v864 = vld [vmem:[%s5 + $0x6ec] sm:$0xff]
    %v865 = vld [vmem:[%s5 + $0x6f4] sm:$0xff]
    %v866 = vld [vmem:[%s5 + $0x6fc] sm:$0xf]
    %v867 = vld [vmem:[%s6] sm:$0xff]
    %v869 = vlaneseq
    %v870 = vshrl.u32 %v869, 7
    %v871 = vsub.s32 0, %v870
    %v872 = vrot.slane %v867, %v871
    %v873 = vlaneseq
    %v874 = vshrl.u32 %v873, 7
    %v875 = vsub.s32 1, %v874
    %v876 = vrot.slane %v867, %v875
    %v877 = vlaneseq
    %v878 = vshrl.u32 %v877, 7
    %v879 = vsub.s32 2, %v878
    %v880 = vrot.slane %v867, %v879
    %v881 = vlaneseq
    %v882 = vshrl.u32 %v881, 7
    %v883 = vsub.s32 3, %v882
    %v884 = vrot.slane %v867, %v883
    %v885 = vlaneseq
    %v886 = vshrl.u32 %v885, 7
    %v887 = vsub.s32 4, %v886
    %v888 = vrot.slane %v867, %v887
    %v889 = vlaneseq
    %v890 = vshrl.u32 %v889, 7
    %v891 = vsub.s32 5, %v890
    %v892 = vrot.slane %v867, %v891
    %v893 = vlaneseq
    %v894 = vshrl.u32 %v893, 7
    %v895 = vsub.s32 6, %v894
    %v896 = vrot.slane %v867, %v895
    %v1160 = vunpack.c.l.b16 %v611
    %v1161 = vunpack.c.h.b16 %v611
    %v1162 = vunpack.c.l.b16 %v612
    %v1163 = vunpack.c.h.b16 %v612
    %v1164 = vunpack.c.l.b16 %v613
    %v1165 = vunpack.c.h.b16 %v613
    %v1166 = vunpack.c.l.b16 %v614
    %v1167 = vunpack.c.l.b16 %v615
    %v1168 = vunpack.c.h.b16 %v615
    %v1169 = vunpack.c.l.b16 %v616
    %v1170 = vunpack.c.h.b16 %v616
    %v1171 = vunpack.c.l.b16 %v617
    %v1172 = vunpack.c.h.b16 %v617
    %v1173 = vunpack.c.l.b16 %v618
    %v1174 = vunpack.c.l.b16 %v619
    %v1175 = vunpack.c.h.b16 %v619
    %v1176 = vunpack.c.l.b16 %v620
    %v1177 = vunpack.c.h.b16 %v620
    %v1178 = vunpack.c.l.b16 %v621
    %v1179 = vunpack.c.h.b16 %v621
    %v1180 = vunpack.c.l.b16 %v622
    %v1181 = vunpack.c.l.b16 %v623
    %v1182 = vunpack.c.h.b16 %v623
    %v1183 = vunpack.c.l.b16 %v624
    %v1184 = vunpack.c.h.b16 %v624
    %v1185 = vunpack.c.l.b16 %v625
    %v1186 = vunpack.c.h.b16 %v625
    %v1187 = vunpack.c.l.b16 %v626
    %v1188 = vunpack.c.l.b16 %v627
    %v1189 = vunpack.c.h.b16 %v627
    %v1190 = vunpack.c.l.b16 %v628
    %v1191 = vunpack.c.h.b16 %v628
    %v1192 = vunpack.c.l.b16 %v629
    %v1193 = vunpack.c.h.b16 %v629
    %v1194 = vunpack.c.l.b16 %v630
    %v1195 = vunpack.c.l.b16 %v631
    %v1196 = vunpack.c.h.b16 %v631
    %v1197 = vunpack.c.l.b16 %v632
    %v1198 = vunpack.c.h.b16 %v632
    %v1199 = vunpack.c.l.b16 %v633
    %v1200 = vunpack.c.h.b16 %v633
    %v1201 = vunpack.c.l.b16 %v634
    %v1202 = vunpack.c.l.b16 %v635
    %v1203 = vunpack.c.h.b16 %v635
    %v1204 = vunpack.c.l.b16 %v636
    %v1205 = vunpack.c.h.b16 %v636
    %v1206 = vunpack.c.l.b16 %v637
    %v1207 = vunpack.c.h.b16 %v637
    %v1208 = vunpack.c.l.b16 %v638
    %v1209 = vunpack.c.l.b16 %v639
    %v1210 = vunpack.c.h.b16 %v639
    %v1211 = vunpack.c.l.b16 %v640
    %v1212 = vunpack.c.h.b16 %v640
    %v1213 = vunpack.c.l.b16 %v641
    %v1214 = vunpack.c.h.b16 %v641
    %v1215 = vunpack.c.l.b16 %v642
    %v1216 = vunpack.c.l.b16 %v643
    %v1217 = vunpack.c.h.b16 %v643
    %v1218 = vunpack.c.l.b16 %v644
    %v1219 = vunpack.c.h.b16 %v644
    %v1220 = vunpack.c.l.b16 %v645
    %v1221 = vunpack.c.h.b16 %v645
    %v1222 = vunpack.c.l.b16 %v646
    %v1223 = vunpack.c.l.b16 %v647
    %v1224 = vunpack.c.h.b16 %v647
    %v1225 = vunpack.c.l.b16 %v648
    %v1226 = vunpack.c.h.b16 %v648
    %v1227 = vunpack.c.l.b16 %v649
    %v1228 = vunpack.c.h.b16 %v649
    %v1229 = vunpack.c.l.b16 %v650
    %v1230 = vunpack.c.l.b16 %v651
    %v1231 = vunpack.c.h.b16 %v651
    %v1232 = vunpack.c.l.b16 %v652
    %v1233 = vunpack.c.h.b16 %v652
    %v1234 = vunpack.c.l.b16 %v653
    %v1235 = vunpack.c.h.b16 %v653
    %v1236 = vunpack.c.l.b16 %v654
    %v1237 = vunpack.c.l.b16 %v655
    %v1238 = vunpack.c.h.b16 %v655
    %v1239 = vunpack.c.l.b16 %v656
    %v1240 = vunpack.c.h.b16 %v656
    %v1241 = vunpack.c.l.b16 %v657
    %v1242 = vunpack.c.h.b16 %v657
    %v1243 = vunpack.c.l.b16 %v658
    %v1244 = vunpack.c.l.b16 %v659
    %v1245 = vunpack.c.h.b16 %v659
    %v1246 = vunpack.c.l.b16 %v660
    %v1247 = vunpack.c.h.b16 %v660
    %v1248 = vunpack.c.l.b16 %v661
    %v1249 = vunpack.c.h.b16 %v661
    %v1250 = vunpack.c.l.b16 %v662
    %v1251 = vunpack.c.l.b16 %v663
    %v1252 = vunpack.c.h.b16 %v663
    %v1253 = vunpack.c.l.b16 %v664
    %v1254 = vunpack.c.h.b16 %v664
    %v1255 = vunpack.c.l.b16 %v665
    %v1256 = vunpack.c.h.b16 %v665
    %v1257 = vunpack.c.l.b16 %v666
    %v1258 = vunpack.c.l.b16 %v667
    %v1259 = vunpack.c.h.b16 %v667
    %v1260 = vunpack.c.l.b16 %v668
    %v1261 = vunpack.c.h.b16 %v668
    %v1262 = vunpack.c.l.b16 %v669
    %v1263 = vunpack.c.h.b16 %v669
    %v1264 = vunpack.c.l.b16 %v670
    %v1265 = vunpack.c.l.b16 %v671
    %v1266 = vunpack.c.h.b16 %v671
    %v1267 = vunpack.c.l.b16 %v672
    %v1268 = vunpack.c.h.b16 %v672
    %v1269 = vunpack.c.l.b16 %v673
    %v1270 = vunpack.c.h.b16 %v673
    %v1271 = vunpack.c.l.b16 %v674
    %v1272 = vunpack.c.l.b16 %v675
    %v1273 = vunpack.c.h.b16 %v675
    %v1274 = vunpack.c.l.b16 %v676
    %v1275 = vunpack.c.h.b16 %v676
    %v1276 = vunpack.c.l.b16 %v677
    %v1277 = vunpack.c.h.b16 %v677
    %v1278 = vunpack.c.l.b16 %v678
    %v1279 = vunpack.c.l.b16 %v679
    %v1280 = vunpack.c.h.b16 %v679
    %v1281 = vunpack.c.l.b16 %v680
    %v1282 = vunpack.c.h.b16 %v680
    %v1283 = vunpack.c.l.b16 %v681
    %v1284 = vunpack.c.h.b16 %v681
    %v1285 = vunpack.c.l.b16 %v682
    %v1286 = vunpack.c.l.b16 %v683
    %v1287 = vunpack.c.h.b16 %v683
    %v1288 = vunpack.c.l.b16 %v684
    %v1289 = vunpack.c.h.b16 %v684
    %v1290 = vunpack.c.l.b16 %v685
    %v1291 = vunpack.c.h.b16 %v685
    %v1292 = vunpack.c.l.b16 %v686
    %v1293 = vunpack.c.l.b16 %v687
    %v1294 = vunpack.c.h.b16 %v687
    %v1295 = vunpack.c.l.b16 %v688
    %v1296 = vunpack.c.h.b16 %v688
    %v1297 = vunpack.c.l.b16 %v689
    %v1298 = vunpack.c.h.b16 %v689
    %v1299 = vunpack.c.l.b16 %v690
    %v1300 = vunpack.c.l.b16 %v691
    %v1301 = vunpack.c.h.b16 %v691
    %v1302 = vunpack.c.l.b16 %v692
    %v1303 = vunpack.c.h.b16 %v692
    %v1304 = vunpack.c.l.b16 %v693
    %v1305 = vunpack.c.h.b16 %v693
    %v1306 = vunpack.c.l.b16 %v694
    %v1307 = vunpack.c.l.b16 %v695
    %v1308 = vunpack.c.h.b16 %v695
    %v1309 = vunpack.c.l.b16 %v696
    %v1310 = vunpack.c.h.b16 %v696
    %v1311 = vunpack.c.l.b16 %v697
    %v1312 = vunpack.c.h.b16 %v697
    %v1313 = vunpack.c.l.b16 %v698
    %v1314 = vunpack.c.l.b16 %v699
    %v1315 = vunpack.c.h.b16 %v699
    %v1316 = vunpack.c.l.b16 %v700
    %v1317 = vunpack.c.h.b16 %v700
    %v1318 = vunpack.c.l.b16 %v701
    %v1319 = vunpack.c.h.b16 %v701
    %v1320 = vunpack.c.l.b16 %v702
    %v1321 = vunpack.c.l.b16 %v703
    %v1322 = vunpack.c.h.b16 %v703
    %v1323 = vunpack.c.l.b16 %v704
    %v1324 = vunpack.c.h.b16 %v704
    %v1325 = vunpack.c.l.b16 %v705
    %v1326 = vunpack.c.h.b16 %v705
    %v1327 = vunpack.c.l.b16 %v706
    %v1328 = vunpack.c.l.b16 %v707
    %v1329 = vunpack.c.h.b16 %v707
    %v1330 = vunpack.c.l.b16 %v708
    %v1331 = vunpack.c.h.b16 %v708
    %v1332 = vunpack.c.l.b16 %v709
    %v1333 = vunpack.c.h.b16 %v709
    %v1334 = vunpack.c.l.b16 %v710
    %v1335 = vunpack.c.l.b16 %v711
    %v1336 = vunpack.c.h.b16 %v711
    %v1337 = vunpack.c.l.b16 %v712
    %v1338 = vunpack.c.h.b16 %v712
    %v1339 = vunpack.c.l.b16 %v713
    %v1340 = vunpack.c.h.b16 %v713
    %v1341 = vunpack.c.l.b16 %v714
    %v1342 = vunpack.c.l.b16 %v715
    %v1343 = vunpack.c.h.b16 %v715
    %v1344 = vunpack.c.l.b16 %v716
    %v1345 = vunpack.c.h.b16 %v716
    %v1346 = vunpack.c.l.b16 %v717
    %v1347 = vunpack.c.h.b16 %v717
    %v1348 = vunpack.c.l.b16 %v718
    %v1349 = vunpack.c.l.b16 %v719
    %v1350 = vunpack.c.h.b16 %v719
    %v1351 = vunpack.c.l.b16 %v720
    %v1352 = vunpack.c.h.b16 %v720
    %v1353 = vunpack.c.l.b16 %v721
    %v1354 = vunpack.c.h.b16 %v721
    %v1355 = vunpack.c.l.b16 %v722
    %v1356 = vunpack.c.l.b16 %v723
    %v1357 = vunpack.c.h.b16 %v723
    %v1358 = vunpack.c.l.b16 %v724
    %v1359 = vunpack.c.h.b16 %v724
    %v1360 = vunpack.c.l.b16 %v725
    %v1361 = vunpack.c.h.b16 %v725
    %v1362 = vunpack.c.l.b16 %v726
    %v1363 = vunpack.c.l.b16 %v727
    %v1364 = vunpack.c.h.b16 %v727
    %v1365 = vunpack.c.l.b16 %v728
    %v1366 = vunpack.c.h.b16 %v728
    %v1367 = vunpack.c.l.b16 %v729
    %v1368 = vunpack.c.h.b16 %v729
    %v1369 = vunpack.c.l.b16 %v730
    %v1370 = vunpack.c.l.b16 %v731
    %v1371 = vunpack.c.h.b16 %v731
    %v1372 = vunpack.c.l.b16 %v732
    %v1373 = vunpack.c.h.b16 %v732
    %v1374 = vunpack.c.l.b16 %v733
    %v1375 = vunpack.c.h.b16 %v733
    %v1376 = vunpack.c.l.b16 %v734
    %v1377 = vunpack.c.l.b16 %v735
    %v1378 = vunpack.c.h.b16 %v735
    %v1379 = vunpack.c.l.b16 %v736
    %v1380 = vunpack.c.h.b16 %v736
    %v1381 = vunpack.c.l.b16 %v737
    %v1382 = vunpack.c.h.b16 %v737
    %v1383 = vunpack.c.l.b16 %v738
    %v1384 = vunpack.c.l.b16 %v739
    %v1385 = vunpack.c.h.b16 %v739
    %v1386 = vunpack.c.l.b16 %v740
    %v1387 = vunpack.c.h.b16 %v740
    %v1388 = vunpack.c.l.b16 %v741
    %v1389 = vunpack.c.h.b16 %v741
    %v1390 = vunpack.c.l.b16 %v742
    %v1391 = vunpack.c.l.b16 %v743
    %v1392 = vunpack.c.h.b16 %v743
    %v1393 = vunpack.c.l.b16 %v744
    %v1394 = vunpack.c.h.b16 %v744
    %v1395 = vunpack.c.l.b16 %v745
    %v1396 = vunpack.c.h.b16 %v745
    %v1397 = vunpack.c.l.b16 %v746
    %v1398 = vunpack.c.l.b16 %v747
    %v1399 = vunpack.c.h.b16 %v747
    %v1400 = vunpack.c.l.b16 %v748
    %v1401 = vunpack.c.h.b16 %v748
    %v1402 = vunpack.c.l.b16 %v749
    %v1403 = vunpack.c.h.b16 %v749
    %v1404 = vunpack.c.l.b16 %v750
    %v1405 = vunpack.c.l.b16 %v751
    %v1406 = vunpack.c.h.b16 %v751
    %v1407 = vunpack.c.l.b16 %v752
    %v1408 = vunpack.c.h.b16 %v752
    %v1409 = vunpack.c.l.b16 %v753
    %v1410 = vunpack.c.h.b16 %v753
    %v1411 = vunpack.c.l.b16 %v754
    %v1412 = vunpack.c.l.b16 %v755
    %v1413 = vunpack.c.h.b16 %v755
    %v1414 = vunpack.c.l.b16 %v756
    %v1415 = vunpack.c.h.b16 %v756
    %v1416 = vunpack.c.l.b16 %v757
    %v1417 = vunpack.c.h.b16 %v757
    %v1418 = vunpack.c.l.b16 %v758
    %v1419 = vunpack.c.l.b16 %v759
    %v1420 = vunpack.c.h.b16 %v759
    %v1421 = vunpack.c.l.b16 %v760
    %v1422 = vunpack.c.h.b16 %v760
    %v1423 = vunpack.c.l.b16 %v761
    %v1424 = vunpack.c.h.b16 %v761
    %v1425 = vunpack.c.l.b16 %v762
    %v1426 = vunpack.c.l.b16 %v763
    %v1427 = vunpack.c.h.b16 %v763
    %v1428 = vunpack.c.l.b16 %v764
    %v1429 = vunpack.c.h.b16 %v764
    %v1430 = vunpack.c.l.b16 %v765
    %v1431 = vunpack.c.h.b16 %v765
    %v1432 = vunpack.c.l.b16 %v766
    %v1433 = vunpack.c.l.b16 %v767
    %v1434 = vunpack.c.h.b16 %v767
    %v1435 = vunpack.c.l.b16 %v768
    %v1436 = vunpack.c.h.b16 %v768
    %v1437 = vunpack.c.l.b16 %v769
    %v1438 = vunpack.c.h.b16 %v769
    %v1439 = vunpack.c.l.b16 %v770
    %v1440 = vunpack.c.l.b16 %v771
    %v1441 = vunpack.c.h.b16 %v771
    %v1442 = vunpack.c.l.b16 %v772
    %v1443 = vunpack.c.h.b16 %v772
    %v1444 = vunpack.c.l.b16 %v773
    %v1445 = vunpack.c.h.b16 %v773
    %v1446 = vunpack.c.l.b16 %v774
    %v1447 = vunpack.c.l.b16 %v775
    %v1448 = vunpack.c.h.b16 %v775
    %v1449 = vunpack.c.l.b16 %v776
    %v1450 = vunpack.c.h.b16 %v776
    %v1451 = vunpack.c.l.b16 %v777
    %v1452 = vunpack.c.h.b16 %v777
    %v1453 = vunpack.c.l.b16 %v778
    %v1454 = vunpack.c.l.b16 %v779
    %v1455 = vunpack.c.h.b16 %v779
    %v1456 = vunpack.c.l.b16 %v780
    %v1457 = vunpack.c.h.b16 %v780
    %v1458 = vunpack.c.l.b16 %v781
    %v1459 = vunpack.c.h.b16 %v781
    %v1460 = vunpack.c.l.b16 %v782
    %v1461 = vunpack.c.l.b16 %v783
    %v1462 = vunpack.c.h.b16 %v783
    %v1463 = vunpack.c.l.b16 %v784
    %v1464 = vunpack.c.h.b16 %v784
    %v1465 = vunpack.c.l.b16 %v785
    %v1466 = vunpack.c.h.b16 %v785
    %v1467 = vunpack.c.l.b16 %v786
    %v1468 = vunpack.c.l.b16 %v787
    %v1469 = vunpack.c.h.b16 %v787
    %v1470 = vunpack.c.l.b16 %v788
    %v1471 = vunpack.c.h.b16 %v788
    %v1472 = vunpack.c.l.b16 %v789
    %v1473 = vunpack.c.h.b16 %v789
    %v1474 = vunpack.c.l.b16 %v790
    %v1475 = vunpack.c.l.b16 %v791
    %v1476 = vunpack.c.h.b16 %v791
    %v1477 = vunpack.c.l.b16 %v792
    %v1478 = vunpack.c.h.b16 %v792
    %v1479 = vunpack.c.l.b16 %v793
    %v1480 = vunpack.c.h.b16 %v793
    %v1481 = vunpack.c.l.b16 %v794
    %v1482 = vunpack.c.l.b16 %v795
    %v1483 = vunpack.c.h.b16 %v795
    %v1484 = vunpack.c.l.b16 %v796
    %v1485 = vunpack.c.h.b16 %v796
    %v1486 = vunpack.c.l.b16 %v797
    %v1487 = vunpack.c.h.b16 %v797
    %v1488 = vunpack.c.l.b16 %v798
    %v1489 = vunpack.c.l.b16 %v799
    %v1490 = vunpack.c.h.b16 %v799
    %v1491 = vunpack.c.l.b16 %v800
    %v1492 = vunpack.c.h.b16 %v800
    %v1493 = vunpack.c.l.b16 %v801
    %v1494 = vunpack.c.h.b16 %v801
    %v1495 = vunpack.c.l.b16 %v802
    %v1496 = vunpack.c.l.b16 %v803
    %v1497 = vunpack.c.h.b16 %v803
    %v1498 = vunpack.c.l.b16 %v804
    %v1499 = vunpack.c.h.b16 %v804
    %v1500 = vunpack.c.l.b16 %v805
    %v1501 = vunpack.c.h.b16 %v805
    %v1502 = vunpack.c.l.b16 %v806
    %v1503 = vunpack.c.l.b16 %v807
    %v1504 = vunpack.c.h.b16 %v807
    %v1505 = vunpack.c.l.b16 %v808
    %v1506 = vunpack.c.h.b16 %v808
    %v1507 = vunpack.c.l.b16 %v809
    %v1508 = vunpack.c.h.b16 %v809
    %v1509 = vunpack.c.l.b16 %v810
    %v1510 = vunpack.c.l.b16 %v811
    %v1511 = vunpack.c.h.b16 %v811
    %v1512 = vunpack.c.l.b16 %v812
    %v1513 = vunpack.c.h.b16 %v812
    %v1514 = vunpack.c.l.b16 %v813
    %v1515 = vunpack.c.h.b16 %v813
    %v1516 = vunpack.c.l.b16 %v814
    %v1517 = vunpack.c.l.b16 %v815
    %v1518 = vunpack.c.h.b16 %v815
    %v1519 = vunpack.c.l.b16 %v816
    %v1520 = vunpack.c.h.b16 %v816
    %v1521 = vunpack.c.l.b16 %v817
    %v1522 = vunpack.c.h.b16 %v817
    %v1523 = vunpack.c.l.b16 %v818
    %v1524 = vunpack.c.l.b16 %v819
    %v1525 = vunpack.c.h.b16 %v819
    %v1526 = vunpack.c.l.b16 %v820
    %v1527 = vunpack.c.h.b16 %v820
    %v1528 = vunpack.c.l.b16 %v821
    %v1529 = vunpack.c.h.b16 %v821
    %v1530 = vunpack.c.l.b16 %v822
    %v1531 = vunpack.c.l.b16 %v823
    %v1532 = vunpack.c.h.b16 %v823
    %v1533 = vunpack.c.l.b16 %v824
    %v1534 = vunpack.c.h.b16 %v824
    %v1535 = vunpack.c.l.b16 %v825
    %v1536 = vunpack.c.h.b16 %v825
    %v1537 = vunpack.c.l.b16 %v826
    %v1538 = vunpack.c.l.b16 %v827
    %v1539 = vunpack.c.h.b16 %v827
    %v1540 = vunpack.c.l.b16 %v828
    %v1541 = vunpack.c.h.b16 %v828
    %v1542 = vunpack.c.l.b16 %v829
    %v1543 = vunpack.c.h.b16 %v829
    %v1544 = vunpack.c.l.b16 %v830
    %v1545 = vunpack.c.l.b16 %v831
    %v1546 = vunpack.c.h.b16 %v831
    %v1547 = vunpack.c.l.b16 %v832
    %v1548 = vunpack.c.h.b16 %v832
    %v1549 = vunpack.c.l.b16 %v833
    %v1550 = vunpack.c.h.b16 %v833
    %v1551 = vunpack.c.l.b16 %v834
    %v1552 = vunpack.c.l.b16 %v835
    %v1553 = vunpack.c.h.b16 %v835
    %v1554 = vunpack.c.l.b16 %v836
    %v1555 = vunpack.c.h.b16 %v836
    %v1556 = vunpack.c.l.b16 %v837
    %v1557 = vunpack.c.h.b16 %v837
    %v1558 = vunpack.c.l.b16 %v838
    %v1559 = vunpack.c.l.b16 %v839
    %v1560 = vunpack.c.h.b16 %v839
    %v1561 = vunpack.c.l.b16 %v840
    %v1562 = vunpack.c.h.b16 %v840
    %v1563 = vunpack.c.l.b16 %v841
    %v1564 = vunpack.c.h.b16 %v841
    %v1565 = vunpack.c.l.b16 %v842
    %v1566 = vunpack.c.l.b16 %v843
    %v1567 = vunpack.c.h.b16 %v843
    %v1568 = vunpack.c.l.b16 %v844
    %v1569 = vunpack.c.h.b16 %v844
    %v1570 = vunpack.c.l.b16 %v845
    %v1571 = vunpack.c.h.b16 %v845
    %v1572 = vunpack.c.l.b16 %v846
    %v1573 = vunpack.c.l.b16 %v847
    %v1574 = vunpack.c.h.b16 %v847
    %v1575 = vunpack.c.l.b16 %v848
    %v1576 = vunpack.c.h.b16 %v848
    %v1577 = vunpack.c.l.b16 %v849
    %v1578 = vunpack.c.h.b16 %v849
    %v1579 = vunpack.c.l.b16 %v850
    %v1580 = vunpack.c.l.b16 %v851
    %v1581 = vunpack.c.h.b16 %v851
    %v1582 = vunpack.c.l.b16 %v852
    %v1583 = vunpack.c.h.b16 %v852
    %v1584 = vunpack.c.l.b16 %v853
    %v1585 = vunpack.c.h.b16 %v853
    %v1586 = vunpack.c.l.b16 %v854
    %v1587 = vunpack.c.l.b16 %v855
    %v1588 = vunpack.c.h.b16 %v855
    %v1589 = vunpack.c.l.b16 %v856
    %v1590 = vunpack.c.h.b16 %v856
    %v1591 = vunpack.c.l.b16 %v857
    %v1592 = vunpack.c.h.b16 %v857
    %v1593 = vunpack.c.l.b16 %v858
    %v1594 = vunpack.c.l.b16 %v859
    %v1595 = vunpack.c.h.b16 %v859
    %v1596 = vunpack.c.l.b16 %v860
    %v1597 = vunpack.c.h.b16 %v860
    %v1598 = vunpack.c.l.b16 %v861
    %v1599 = vunpack.c.h.b16 %v861
    %v1600 = vunpack.c.l.b16 %v862
    %v1601 = vunpack.c.l.b16 %v863
    %v1602 = vunpack.c.h.b16 %v863
    %v1603 = vunpack.c.l.b16 %v864
    %v1604 = vunpack.c.h.b16 %v864
    %v1605 = vunpack.c.l.b16 %v865
    %v1606 = vunpack.c.h.b16 %v865
    %v1607 = vunpack.c.l.b16 %v866
    %v1608 = vpack.c.b16 %v1167, %v1160
    %v1609 = vpack.c.b16 %v1168, %v1161
    %v1610 = vpack.c.b16 %v1169, %v1162
    %v1611 = vpack.c.b16 %v1170, %v1163
    %v1612 = vpack.c.b16 %v1171, %v1164
    %v1613 = vpack.c.b16 %v1172, %v1165
    %v1614 = vpack.c.b16 %v1173, %v1166
    %v1615 = vpack.c.b16 %v1181, %v1174
    %v1616 = vpack.c.b16 %v1182, %v1175
    %v1617 = vpack.c.b16 %v1183, %v1176
    %v1618 = vpack.c.b16 %v1184, %v1177
    %v1619 = vpack.c.b16 %v1185, %v1178
    %v1620 = vpack.c.b16 %v1186, %v1179
    %v1621 = vpack.c.b16 %v1187, %v1180
    %v1622 = vpack.c.b16 %v1195, %v1188
    %v1623 = vpack.c.b16 %v1196, %v1189
    %v1624 = vpack.c.b16 %v1197, %v1190
    %v1625 = vpack.c.b16 %v1198, %v1191
    %v1626 = vpack.c.b16 %v1199, %v1192
    %v1627 = vpack.c.b16 %v1200, %v1193
    %v1628 = vpack.c.b16 %v1201, %v1194
    %v1629 = vpack.c.b16 %v1209, %v1202
    %v1630 = vpack.c.b16 %v1210, %v1203
    %v1631 = vpack.c.b16 %v1211, %v1204
    %v1632 = vpack.c.b16 %v1212, %v1205
    %v1633 = vpack.c.b16 %v1213, %v1206
    %v1634 = vpack.c.b16 %v1214, %v1207
    %v1635 = vpack.c.b16 %v1215, %v1208
    %v1636 = vpack.c.b16 %v1223, %v1216
    %v1637 = vpack.c.b16 %v1224, %v1217
    %v1638 = vpack.c.b16 %v1225, %v1218
    %v1639 = vpack.c.b16 %v1226, %v1219
    %v1640 = vpack.c.b16 %v1227, %v1220
    %v1641 = vpack.c.b16 %v1228, %v1221
    %v1642 = vpack.c.b16 %v1229, %v1222
    %v1643 = vpack.c.b16 %v1237, %v1230
    %v1644 = vpack.c.b16 %v1238, %v1231
    %v1645 = vpack.c.b16 %v1239, %v1232
    %v1646 = vpack.c.b16 %v1240, %v1233
    %v1647 = vpack.c.b16 %v1241, %v1234
    %v1648 = vpack.c.b16 %v1242, %v1235
    %v1649 = vpack.c.b16 %v1243, %v1236
    %v1650 = vpack.c.b16 %v1251, %v1244
    %v1651 = vpack.c.b16 %v1252, %v1245
    %v1652 = vpack.c.b16 %v1253, %v1246
    %v1653 = vpack.c.b16 %v1254, %v1247
    %v1654 = vpack.c.b16 %v1255, %v1248
    %v1655 = vpack.c.b16 %v1256, %v1249
    %v1656 = vpack.c.b16 %v1257, %v1250
    %v1657 = vpack.c.b16 %v1265, %v1258
    %v1658 = vpack.c.b16 %v1266, %v1259
    %v1659 = vpack.c.b16 %v1267, %v1260
    %v1660 = vpack.c.b16 %v1268, %v1261
    %v1661 = vpack.c.b16 %v1269, %v1262
    %v1662 = vpack.c.b16 %v1270, %v1263
    %v1663 = vpack.c.b16 %v1271, %v1264
    %v1664 = vpack.c.b16 %v1279, %v1272
    %v1665 = vpack.c.b16 %v1280, %v1273
    %v1666 = vpack.c.b16 %v1281, %v1274
    %v1667 = vpack.c.b16 %v1282, %v1275
    %v1668 = vpack.c.b16 %v1283, %v1276
    %v1669 = vpack.c.b16 %v1284, %v1277
    %v1670 = vpack.c.b16 %v1285, %v1278
    %v1671 = vpack.c.b16 %v1293, %v1286
    %v1672 = vpack.c.b16 %v1294, %v1287
    %v1673 = vpack.c.b16 %v1295, %v1288
    %v1674 = vpack.c.b16 %v1296, %v1289
    %v1675 = vpack.c.b16 %v1297, %v1290
    %v1676 = vpack.c.b16 %v1298, %v1291
    %v1677 = vpack.c.b16 %v1299, %v1292
    %v1678 = vpack.c.b16 %v1307, %v1300
    %v1679 = vpack.c.b16 %v1308, %v1301
    %v1680 = vpack.c.b16 %v1309, %v1302
    %v1681 = vpack.c.b16 %v1310, %v1303
    %v1682 = vpack.c.b16 %v1311, %v1304
    %v1683 = vpack.c.b16 %v1312, %v1305
    %v1684 = vpack.c.b16 %v1313, %v1306
    %v1685 = vpack.c.b16 %v1321, %v1314
    %v1686 = vpack.c.b16 %v1322, %v1315
    %v1687 = vpack.c.b16 %v1323, %v1316
    %v1688 = vpack.c.b16 %v1324, %v1317
    %v1689 = vpack.c.b16 %v1325, %v1318
    %v1690 = vpack.c.b16 %v1326, %v1319
    %v1691 = vpack.c.b16 %v1327, %v1320
    %v1692 = vpack.c.b16 %v1335, %v1328
    %v1693 = vpack.c.b16 %v1336, %v1329
    %v1694 = vpack.c.b16 %v1337, %v1330
    %v1695 = vpack.c.b16 %v1338, %v1331
    %v1696 = vpack.c.b16 %v1339, %v1332
    %v1697 = vpack.c.b16 %v1340, %v1333
    %v1698 = vpack.c.b16 %v1341, %v1334
    %v1699 = vpack.c.b16 %v1349, %v1342
    %v1700 = vpack.c.b16 %v1350, %v1343
    %v1701 = vpack.c.b16 %v1351, %v1344
    %v1702 = vpack.c.b16 %v1352, %v1345
    %v1703 = vpack.c.b16 %v1353, %v1346
    %v1704 = vpack.c.b16 %v1354, %v1347
    %v1705 = vpack.c.b16 %v1355, %v1348
    %v1706 = vpack.c.b16 %v1363, %v1356
    %v1707 = vpack.c.b16 %v1364, %v1357
    %v1708 = vpack.c.b16 %v1365, %v1358
    %v1709 = vpack.c.b16 %v1366, %v1359
    %v1710 = vpack.c.b16 %v1367, %v1360
    %v1711 = vpack.c.b16 %v1368, %v1361
    %v1712 = vpack.c.b16 %v1369, %v1362
    %v1713 = vpack.c.b16 %v1377, %v1370
    %v1714 = vpack.c.b16 %v1378, %v1371
    %v1715 = vpack.c.b16 %v1379, %v1372
    %v1716 = vpack.c.b16 %v1380, %v1373
    %v1717 = vpack.c.b16 %v1381, %v1374
    %v1718 = vpack.c.b16 %v1382, %v1375
    %v1719 = vpack.c.b16 %v1383, %v1376
    %v1720 = vpack.c.b16 %v1391, %v1384
    %v1721 = vpack.c.b16 %v1392, %v1385
    %v1722 = vpack.c.b16 %v1393, %v1386
    %v1723 = vpack.c.b16 %v1394, %v1387
    %v1724 = vpack.c.b16 %v1395, %v1388
    %v1725 = vpack.c.b16 %v1396, %v1389
    %v1726 = vpack.c.b16 %v1397, %v1390
    %v1727 = vpack.c.b16 %v1405, %v1398
    %v1728 = vpack.c.b16 %v1406, %v1399
    %v1729 = vpack.c.b16 %v1407, %v1400
    %v1730 = vpack.c.b16 %v1408, %v1401
    %v1731 = vpack.c.b16 %v1409, %v1402
    %v1732 = vpack.c.b16 %v1410, %v1403
    %v1733 = vpack.c.b16 %v1411, %v1404
    %v1734 = vpack.c.b16 %v1419, %v1412
    %v1735 = vpack.c.b16 %v1420, %v1413
    %v1736 = vpack.c.b16 %v1421, %v1414
    %v1737 = vpack.c.b16 %v1422, %v1415
    %v1738 = vpack.c.b16 %v1423, %v1416
    %v1739 = vpack.c.b16 %v1424, %v1417
    %v1740 = vpack.c.b16 %v1425, %v1418
    %v1741 = vpack.c.b16 %v1433, %v1426
    %v1742 = vpack.c.b16 %v1434, %v1427
    %v1743 = vpack.c.b16 %v1435, %v1428
    %v1744 = vpack.c.b16 %v1436, %v1429
    %v1745 = vpack.c.b16 %v1437, %v1430
    %v1746 = vpack.c.b16 %v1438, %v1431
    %v1747 = vpack.c.b16 %v1439, %v1432
    %v1748 = vpack.c.b16 %v1447, %v1440
    %v1749 = vpack.c.b16 %v1448, %v1441
    %v1750 = vpack.c.b16 %v1449, %v1442
    %v1751 = vpack.c.b16 %v1450, %v1443
    %v1752 = vpack.c.b16 %v1451, %v1444
    %v1753 = vpack.c.b16 %v1452, %v1445
    %v1754 = vpack.c.b16 %v1453, %v1446
    %v1755 = vpack.c.b16 %v1461, %v1454
    %v1756 = vpack.c.b16 %v1462, %v1455
    %v1757 = vpack.c.b16 %v1463, %v1456
    %v1758 = vpack.c.b16 %v1464, %v1457
    %v1759 = vpack.c.b16 %v1465, %v1458
    %v1760 = vpack.c.b16 %v1466, %v1459
    %v1761 = vpack.c.b16 %v1467, %v1460
    %v1762 = vpack.c.b16 %v1475, %v1468
    %v1763 = vpack.c.b16 %v1476, %v1469
    %v1764 = vpack.c.b16 %v1477, %v1470
    %v1765 = vpack.c.b16 %v1478, %v1471
    %v1766 = vpack.c.b16 %v1479, %v1472
    %v1767 = vpack.c.b16 %v1480, %v1473
    %v1768 = vpack.c.b16 %v1481, %v1474
    %v1769 = vpack.c.b16 %v1489, %v1482
    %v1770 = vpack.c.b16 %v1490, %v1483
    %v1771 = vpack.c.b16 %v1491, %v1484
    %v1772 = vpack.c.b16 %v1492, %v1485
    %v1773 = vpack.c.b16 %v1493, %v1486
    %v1774 = vpack.c.b16 %v1494, %v1487
    %v1775 = vpack.c.b16 %v1495, %v1488
    %v1776 = vpack.c.b16 %v1503, %v1496
    %v1777 = vpack.c.b16 %v1504, %v1497
    %v1778 = vpack.c.b16 %v1505, %v1498
    %v1779 = vpack.c.b16 %v1506, %v1499
    %v1780 = vpack.c.b16 %v1507, %v1500
    %v1781 = vpack.c.b16 %v1508, %v1501
    %v1782 = vpack.c.b16 %v1509, %v1502
    %v1783 = vpack.c.b16 %v1517, %v1510
    %v1784 = vpack.c.b16 %v1518, %v1511
    %v1785 = vpack.c.b16 %v1519, %v1512
    %v1786 = vpack.c.b16 %v1520, %v1513
    %v1787 = vpack.c.b16 %v1521, %v1514
    %v1788 = vpack.c.b16 %v1522, %v1515
    %v1789 = vpack.c.b16 %v1523, %v1516
    %v1790 = vpack.c.b16 %v1531, %v1524
    %v1791 = vpack.c.b16 %v1532, %v1525
    %v1792 = vpack.c.b16 %v1533, %v1526
    %v1793 = vpack.c.b16 %v1534, %v1527
    %v1794 = vpack.c.b16 %v1535, %v1528
    %v1795 = vpack.c.b16 %v1536, %v1529
    %v1796 = vpack.c.b16 %v1537, %v1530
    %v1797 = vpack.c.b16 %v1545, %v1538
    %v1798 = vpack.c.b16 %v1546, %v1539
    %v1799 = vpack.c.b16 %v1547, %v1540
    %v1800 = vpack.c.b16 %v1548, %v1541
    %v1801 = vpack.c.b16 %v1549, %v1542
    %v1802 = vpack.c.b16 %v1550, %v1543
    %v1803 = vpack.c.b16 %v1551, %v1544
    %v1804 = vpack.c.b16 %v1559, %v1552
    %v1805 = vpack.c.b16 %v1560, %v1553
    %v1806 = vpack.c.b16 %v1561, %v1554
    %v1807 = vpack.c.b16 %v1562, %v1555
    %v1808 = vpack.c.b16 %v1563, %v1556
    %v1809 = vpack.c.b16 %v1564, %v1557
    %v1810 = vpack.c.b16 %v1565, %v1558
    %v1811 = vpack.c.b16 %v1573, %v1566
    %v1812 = vpack.c.b16 %v1574, %v1567
    %v1813 = vpack.c.b16 %v1575, %v1568
    %v1814 = vpack.c.b16 %v1576, %v1569
    %v1815 = vpack.c.b16 %v1577, %v1570
    %v1816 = vpack.c.b16 %v1578, %v1571
    %v1817 = vpack.c.b16 %v1579, %v1572
    %v1818 = vpack.c.b16 %v1587, %v1580
    %v1819 = vpack.c.b16 %v1588, %v1581
    %v1820 = vpack.c.b16 %v1589, %v1582
    %v1821 = vpack.c.b16 %v1590, %v1583
    %v1822 = vpack.c.b16 %v1591, %v1584
    %v1823 = vpack.c.b16 %v1592, %v1585
    %v1824 = vpack.c.b16 %v1593, %v1586
    %v1825 = vpack.c.b16 %v1601, %v1594
    %v1826 = vpack.c.b16 %v1602, %v1595
    %v1827 = vpack.c.b16 %v1603, %v1596
    %v1828 = vpack.c.b16 %v1604, %v1597
    %v1829 = vpack.c.b16 %v1605, %v1598
    %v1830 = vpack.c.b16 %v1606, %v1599
    %v1831 = vpack.c.b16 %v1607, %v1600
    %2056 = vmatprep.subr.bf16.mxu0 %v1658
    %2057 = vmatpush1.bf16.msra.mxu0 %v1657
    %2058 = vmatprep.subr.bf16.mxu0 %v1651
    %2059 = vmatpush1.bf16.msra.mxu0 %v1650
    %2060 = vmatprep.subr.bf16.mxu0 %v1644
    %2061 = vmatpush1.bf16.msra.mxu0 %v1643
    %2062 = vmatprep.subr.bf16.mxu0 %v1637
    %2063 = vmatpush1.bf16.msra.mxu0 %v1636
    %2064 = vmatprep.subr.bf16.mxu0 %v1630
    %2065 = vmatpush1.bf16.msra.mxu0 %v1629
    %2066 = vmatprep.subr.bf16.mxu0 %v1623
    %2067 = vmatpush1.bf16.msra.mxu0 %v1622
    %2068 = vmatprep.subr.bf16.mxu0 %v1616
    %2069 = vmatpush1.bf16.msra.mxu0 %v1615
    %2070 = vmatprep.subr.bf16.mxu0 %v1609
    %2071 = vmatpush1.bf16.msra.mxu0 %v1608
    %2072 = vmatprep.subr.bf16.mxu0 %v1714
    %2073 = vmatpush2.bf16.msra.mxu0 %v1713
    %2074 = vmatprep.subr.bf16.mxu0 %v1707
    %2075 = vmatpush2.bf16.msra.mxu0 %v1706
    %2076 = vmatprep.subr.bf16.mxu0 %v1700
    %2077 = vmatpush2.bf16.msra.mxu0 %v1699
    %2078 = vmatprep.subr.bf16.mxu0 %v1693
    %2079 = vmatpush2.bf16.msra.mxu0 %v1692
    %2080 = vmatprep.subr.bf16.mxu0 %v1686
    %2081 = vmatpush2.bf16.msra.mxu0 %v1685
    %2082 = vmatprep.subr.bf16.mxu0 %v1679
    %2083 = vmatpush2.bf16.msra.mxu0 %v1678
    %2084 = vmatprep.subr.bf16.mxu0 %v1672
    %2085 = vmatpush2.bf16.msra.mxu0 %v1671
    %2086 = vmatprep.subr.bf16.mxu0 %v1665
    %2087 = vmatpush2.bf16.msra.mxu0 %v1664
    %2088 = vmatprep.mubr.bf16.mxu0 %v608
    %2089 = vmatmul.mubr.bf16.gmra.mxu0 %v607
    %v2090 = vpop.f32.mrf.mxu0
    %v2091 = vadd.f32 %v872, %v2090
    %v2092 = vpop.f32.mrf.mxu0
    %v2093 = vadd.f32 %v876, %v2092
    %v2094 = vpop.f32.mrf.mxu0
    %v2095 = vpop.f32.mrf.mxu0
    %2096 = vdwg.mxu0
    %2097 = vmatprep.subr.bf16.mxu0 %v1770
    %2098 = vmatpush1.bf16.msra.mxu0 %v1769
    %2099 = vmatprep.subr.bf16.mxu0 %v1763
    %2100 = vmatpush1.bf16.msra.mxu0 %v1762
    %2101 = vmatprep.subr.bf16.mxu0 %v1756
    %2102 = vmatpush1.bf16.msra.mxu0 %v1755
    %2103 = vmatprep.subr.bf16.mxu0 %v1749
    %2104 = vmatpush1.bf16.msra.mxu0 %v1748
    %2105 = vmatprep.subr.bf16.mxu0 %v1742
    %2106 = vmatpush1.bf16.msra.mxu0 %v1741
    %2107 = vmatprep.subr.bf16.mxu0 %v1735
    %2108 = vmatpush1.bf16.msra.mxu0 %v1734
    %2109 = vmatprep.subr.bf16.mxu0 %v1728
    %2110 = vmatpush1.bf16.msra.mxu0 %v1727
    %2111 = vmatprep.subr.bf16.mxu0 %v1721
    %2112 = vmatpush1.bf16.msra.mxu0 %v1720
    %2113 = vmatprep.subr.bf16.mxu0 %v1826
    %2114 = vmatpush2.bf16.msra.mxu0 %v1825
    %2115 = vmatprep.subr.bf16.mxu0 %v1819
    %2116 = vmatpush2.bf16.msra.mxu0 %v1818
    %2117 = vmatprep.subr.bf16.mxu0 %v1812
    %2118 = vmatpush2.bf16.msra.mxu0 %v1811
    %2119 = vmatprep.subr.bf16.mxu0 %v1805
    %2120 = vmatpush2.bf16.msra.mxu0 %v1804
    %2121 = vmatprep.subr.bf16.mxu0 %v1798
    %2122 = vmatpush2.bf16.msra.mxu0 %v1797
    %2123 = vmatprep.subr.bf16.mxu0 %v1791
    %2124 = vmatpush2.bf16.msra.mxu0 %v1790
    %2125 = vmatprep.subr.bf16.mxu0 %v1784
    %2126 = vmatpush2.bf16.msra.mxu0 %v1783
    %2127 = vmatprep.subr.bf16.mxu0 %v1777
    %2128 = vmatpush2.bf16.msra.mxu0 %v1776
    %2129 = vmatprep.mubr.bf16.mxu0 %v610
    %2130 = vmatmul.mubr.bf16.gmra.mxu0 %v609
    %v2131 = vpop.f32.mrf.mxu0
    %v2132 = vadd.f32 %v2091, %v2131
    %v2133 = vpop.f32.mrf.mxu0
    %v2134 = vadd.f32 %v2093, %v2133
    %v2135 = vpop.f32.mrf.mxu0
    %v2136 = vpop.f32.mrf.mxu0
    %2137 = vdwg.mxu0
    %2138 = vmatprep.subr.bf16.mxu0 %v1660
    %2139 = vmatpush1.bf16.msra.mxu0 %v1659
    %2140 = vmatprep.subr.bf16.mxu0 %v1653
    %2141 = vmatpush1.bf16.msra.mxu0 %v1652
    %2142 = vmatprep.subr.bf16.mxu0 %v1646
    %2143 = vmatpush1.bf16.msra.mxu0 %v1645
    %2144 = vmatprep.subr.bf16.mxu0 %v1639
    %2145 = vmatpush1.bf16.msra.mxu0 %v1638
    %2146 = vmatprep.subr.bf16.mxu0 %v1632
    %2147 = vmatpush1.bf16.msra.mxu0 %v1631
    %2148 = vmatprep.subr.bf16.mxu0 %v1625
    %2149 = vmatpush1.bf16.msra.mxu0 %v1624
    %2150 = vmatprep.subr.bf16.mxu0 %v1618
    %2151 = vmatpush1.bf16.msra.mxu0 %v1617
    %2152 = vmatprep.subr.bf16.mxu0 %v1611
    %2153 = vmatpush1.bf16.msra.mxu0 %v1610
    %2154 = vmatprep.subr.bf16.mxu0 %v1716
    %2155 = vmatpush2.bf16.msra.mxu0 %v1715
    %2156 = vmatprep.subr.bf16.mxu0 %v1709
    %2157 = vmatpush2.bf16.msra.mxu0 %v1708
    %2158 = vmatprep.subr.bf16.mxu0 %v1702
    %2159 = vmatpush2.bf16.msra.mxu0 %v1701
    %2160 = vmatprep.subr.bf16.mxu0 %v1695
    %2161 = vmatpush2.bf16.msra.mxu0 %v1694
    %2162 = vmatprep.subr.bf16.mxu0 %v1688
    %2163 = vmatpush2.bf16.msra.mxu0 %v1687
    %2164 = vmatprep.subr.bf16.mxu0 %v1681
    %2165 = vmatpush2.bf16.msra.mxu0 %v1680
    %2166 = vmatprep.subr.bf16.mxu0 %v1674
    %2167 = vmatpush2.bf16.msra.mxu0 %v1673
    %2168 = vmatprep.subr.bf16.mxu0 %v1667
    %2169 = vmatpush2.bf16.msra.mxu0 %v1666
    %2170 = vmatprep.mubr.bf16.mxu0 %v608
    %2171 = vmatmul.mubr.bf16.gmra.mxu0 %v607
    %v2172 = vpop.f32.mrf.mxu0
    %v2173 = vadd.f32 %v880, %v2172
    %v2174 = vpop.f32.mrf.mxu0
    %v2175 = vadd.f32 %v884, %v2174
    %v2176 = vpop.f32.mrf.mxu0
    %v2177 = vpop.f32.mrf.mxu0
    %2178 = vdwg.mxu0
    %2179 = vmatprep.subr.bf16.mxu0 %v1772
    %2180 = vmatpush1.bf16.msra.mxu0 %v1771
    %2181 = vmatprep.subr.bf16.mxu0 %v1765
    %2182 = vmatpush1.bf16.msra.mxu0 %v1764
    %2183 = vmatprep.subr.bf16.mxu0 %v1758
    %2184 = vmatpush1.bf16.msra.mxu0 %v1757
    %2185 = vmatprep.subr.bf16.mxu0 %v1751
    %2186 = vmatpush1.bf16.msra.mxu0 %v1750
    %2187 = vmatprep.subr.bf16.mxu0 %v1744
    %2188 = vmatpush1.bf16.msra.mxu0 %v1743
    %2189 = vmatprep.subr.bf16.mxu0 %v1737
    %2190 = vmatpush1.bf16.msra.mxu0 %v1736
    %2191 = vmatprep.subr.bf16.mxu0 %v1730
    %2192 = vmatpush1.bf16.msra.mxu0 %v1729
    %2193 = vmatprep.subr.bf16.mxu0 %v1723
    %2194 = vmatpush1.bf16.msra.mxu0 %v1722
    %2195 = vmatprep.subr.bf16.mxu0 %v1828
    %2196 = vmatpush2.bf16.msra.mxu0 %v1827
    %2197 = vmatprep.subr.bf16.mxu0 %v1821
    %2198 = vmatpush2.bf16.msra.mxu0 %v1820
    %2199 = vmatprep.subr.bf16.mxu0 %v1814
    %2200 = vmatpush2.bf16.msra.mxu0 %v1813
    %2201 = vmatprep.subr.bf16.mxu0 %v1807
    %2202 = vmatpush2.bf16.msra.mxu0 %v1806
    %2203 = vmatprep.subr.bf16.mxu0 %v1800
    %2204 = vmatpush2.bf16.msra.mxu0 %v1799
    %2205 = vmatprep.subr.bf16.mxu0 %v1793
    %2206 = vmatpush2.bf16.msra.mxu0 %v1792
    %2207 = vmatprep.subr.bf16.mxu0 %v1786
    %2208 = vmatpush2.bf16.msra.mxu0 %v1785
    %2209 = vmatprep.subr.bf16.mxu0 %v1779
    %2210 = vmatpush2.bf16.msra.mxu0 %v1778
    %2211 = vmatprep.mubr.bf16.mxu0 %v610
    %2212 = vmatmul.mubr.bf16.gmra.mxu0 %v609
    %v2213 = vpop.f32.mrf.mxu0
    %v2214 = vadd.f32 %v2173, %v2213
    %v2215 = vpop.f32.mrf.mxu0
    %v2216 = vadd.f32 %v2175, %v2215
    %v2217 = vpop.f32.mrf.mxu0
    %v2218 = vpop.f32.mrf.mxu0
    %2219 = vdwg.mxu0
    %2220 = vmatprep.subr.bf16.mxu0 %v1662
    %2221 = vmatpush1.bf16.msra.mxu0 %v1661
    %2222 = vmatprep.subr.bf16.mxu0 %v1655
    %2223 = vmatpush1.bf16.msra.mxu0 %v1654
    %2224 = vmatprep.subr.bf16.mxu0 %v1648
    %2225 = vmatpush1.bf16.msra.mxu0 %v1647
    %2226 = vmatprep.subr.bf16.mxu0 %v1641
    %2227 = vmatpush1.bf16.msra.mxu0 %v1640
    %2228 = vmatprep.subr.bf16.mxu0 %v1634
    %2229 = vmatpush1.bf16.msra.mxu0 %v1633
    %2230 = vmatprep.subr.bf16.mxu0 %v1627
    %2231 = vmatpush1.bf16.msra.mxu0 %v1626
    %2232 = vmatprep.subr.bf16.mxu0 %v1620
    %2233 = vmatpush1.bf16.msra.mxu0 %v1619
    %2234 = vmatprep.subr.bf16.mxu0 %v1613
    %2235 = vmatpush1.bf16.msra.mxu0 %v1612
    %2236 = vmatprep.subr.bf16.mxu0 %v1718
    %2237 = vmatpush2.bf16.msra.mxu0 %v1717
    %2238 = vmatprep.subr.bf16.mxu0 %v1711
    %2239 = vmatpush2.bf16.msra.mxu0 %v1710
    %2240 = vmatprep.subr.bf16.mxu0 %v1704
    %2241 = vmatpush2.bf16.msra.mxu0 %v1703
    %2242 = vmatprep.subr.bf16.mxu0 %v1697
    %2243 = vmatpush2.bf16.msra.mxu0 %v1696
    %2244 = vmatprep.subr.bf16.mxu0 %v1690
    %2245 = vmatpush2.bf16.msra.mxu0 %v1689
    %2246 = vmatprep.subr.bf16.mxu0 %v1683
    %2247 = vmatpush2.bf16.msra.mxu0 %v1682
    %2248 = vmatprep.subr.bf16.mxu0 %v1676
    %2249 = vmatpush2.bf16.msra.mxu0 %v1675
    %2250 = vmatprep.subr.bf16.mxu0 %v1669
    %2251 = vmatpush2.bf16.msra.mxu0 %v1668
    %2252 = vmatprep.mubr.bf16.mxu0 %v608
    %2253 = vmatmul.mubr.bf16.gmra.mxu0 %v607
    %v2254 = vpop.f32.mrf.mxu0
    %v2255 = vadd.f32 %v888, %v2254
    %v2256 = vpop.f32.mrf.mxu0
    %v2257 = vadd.f32 %v892, %v2256
    %v2258 = vpop.f32.mrf.mxu0
    %v2259 = vpop.f32.mrf.mxu0
    %2260 = vdwg.mxu0
    %2261 = vmatprep.subr.bf16.mxu0 %v1774
    %2262 = vmatpush1.bf16.msra.mxu0 %v1773
    %2263 = vmatprep.subr.bf16.mxu0 %v1767
    %2264 = vmatpush1.bf16.msra.mxu0 %v1766
    %2265 = vmatprep.subr.bf16.mxu0 %v1760
    %2266 = vmatpush1.bf16.msra.mxu0 %v1759
    %2267 = vmatprep.subr.bf16.mxu0 %v1753
    %2268 = vmatpush1.bf16.msra.mxu0 %v1752
    %2269 = vmatprep.subr.bf16.mxu0 %v1746
    %2270 = vmatpush1.bf16.msra.mxu0 %v1745
    %2271 = vmatprep.subr.bf16.mxu0 %v1739
    %2272 = vmatpush1.bf16.msra.mxu0 %v1738
    %2273 = vmatprep.subr.bf16.mxu0 %v1732
    %2274 = vmatpush1.bf16.msra.mxu0 %v1731
    %2275 = vmatprep.subr.bf16.mxu0 %v1725
    %2276 = vmatpush1.bf16.msra.mxu0 %v1724
    %2277 = vmatprep.subr.bf16.mxu0 %v1830
    %2278 = vmatpush2.bf16.msra.mxu0 %v1829
    %2279 = vmatprep.subr.bf16.mxu0 %v1823
    %2280 = vmatpush2.bf16.msra.mxu0 %v1822
    %2281 = vmatprep.subr.bf16.mxu0 %v1816
    %2282 = vmatpush2.bf16.msra.mxu0 %v1815
    %2283 = vmatprep.subr.bf16.mxu0 %v1809
    %2284 = vmatpush2.bf16.msra.mxu0 %v1808
    %2285 = vmatprep.subr.bf16.mxu0 %v1802
    %2286 = vmatpush2.bf16.msra.mxu0 %v1801
    %2287 = vmatprep.subr.bf16.mxu0 %v1795
    %2288 = vmatpush2.bf16.msra.mxu0 %v1794
    %2289 = vmatprep.subr.bf16.mxu0 %v1788
    %2290 = vmatpush2.bf16.msra.mxu0 %v1787
    %2291 = vmatprep.subr.bf16.mxu0 %v1781
    %2292 = vmatpush2.bf16.msra.mxu0 %v1780
    %2293 = vmatprep.mubr.bf16.mxu0 %v610
    %2294 = vmatmul.mubr.bf16.gmra.mxu0 %v609
    %v2295 = vpop.f32.mrf.mxu0
    %v2296 = vadd.f32 %v2255, %v2295
    %v2297 = vpop.f32.mrf.mxu0
    %v2298 = vadd.f32 %v2257, %v2297
    %v2299 = vpop.f32.mrf.mxu0
    %v2300 = vpop.f32.mrf.mxu0
    %2301 = vdwg.mxu0
    %2302 = vmatprep.subr.bf16.mxu0 0
    %2303 = vmatpush1.bf16.msra.mxu0 %v1663
    %2304 = vmatprep.subr.bf16.mxu0 0
    %2305 = vmatpush1.bf16.msra.mxu0 %v1656
    %2306 = vmatprep.subr.bf16.mxu0 0
    %2307 = vmatpush1.bf16.msra.mxu0 %v1649
    %2308 = vmatprep.subr.bf16.mxu0 0
    %2309 = vmatpush1.bf16.msra.mxu0 %v1642
    %2310 = vmatprep.subr.bf16.mxu0 0
    %2311 = vmatpush1.bf16.msra.mxu0 %v1635
    %2312 = vmatprep.subr.bf16.mxu0 0
    %2313 = vmatpush1.bf16.msra.mxu0 %v1628
    %2314 = vmatprep.subr.bf16.mxu0 0
    %2315 = vmatpush1.bf16.msra.mxu0 %v1621
    %2316 = vmatprep.subr.bf16.mxu0 0
    %2317 = vmatpush1.bf16.msra.mxu0 %v1614
    %2318 = vmatprep.subr.bf16.mxu0 0
    %2319 = vmatpush2.bf16.msra.mxu0 %v1719
    %2320 = vmatprep.subr.bf16.mxu0 0
    %2321 = vmatpush2.bf16.msra.mxu0 %v1712
    %2322 = vmatprep.subr.bf16.mxu0 0
    %2323 = vmatpush2.bf16.msra.mxu0 %v1705
    %2324 = vmatprep.subr.bf16.mxu0 0
    %2325 = vmatpush2.bf16.msra.mxu0 %v1698
    %2326 = vmatprep.subr.bf16.mxu0 0
    %2327 = vmatpush2.bf16.msra.mxu0 %v1691
    %2328 = vmatprep.subr.bf16.mxu0 0
    %2329 = vmatpush2.bf16.msra.mxu0 %v1684
    %2330 = vmatprep.subr.bf16.mxu0 0
    %2331 = vmatpush2.bf16.msra.mxu0 %v1677
    %2332 = vmatprep.subr.bf16.mxu0 0
    %2333 = vmatpush2.bf16.msra.mxu0 %v1670
    %2334 = vmatprep.mubr.bf16.mxu0 %v608
    %2335 = vmatmul.mubr.bf16.gmra.mxu0 %v607
    %v2336 = vpop.f32.mrf.mxu0
    %v2337 = vadd.f32 %v896, %v2336
    %v2338 = vpop.f32.mrf.mxu0
    %v2339 = vpop.f32.mrf.mxu0
    %v2340 = vpop.f32.mrf.mxu0
    %2341 = vdwg.mxu0
    %2342 = vmatprep.subr.bf16.mxu0 0
    %2343 = vmatpush1.bf16.msra.mxu0 %v1775
    %2344 = vmatprep.subr.bf16.mxu0 0
    %2345 = vmatpush1.bf16.msra.mxu0 %v1768
    %2346 = vmatprep.subr.bf16.mxu0 0
    %2347 = vmatpush1.bf16.msra.mxu0 %v1761
    %2348 = vmatprep.subr.bf16.mxu0 0
    %2349 = vmatpush1.bf16.msra.mxu0 %v1754
    %2350 = vmatprep.subr.bf16.mxu0 0
    %2351 = vmatpush1.bf16.msra.mxu0 %v1747
    %2352 = vmatprep.subr.bf16.mxu0 0
    %2353 = vmatpush1.bf16.msra.mxu0 %v1740
    %2354 = vmatprep.subr.bf16.mxu0 0
    %2355 = vmatpush1.bf16.msra.mxu0 %v1733
    %2356 = vmatprep.subr.bf16.mxu0 0
    %2357 = vmatpush1.bf16.msra.mxu0 %v1726
    %2358 = vmatprep.subr.bf16.mxu0 0
    %2359 = vmatpush2.bf16.msra.mxu0 %v1831
    %2360 = vmatprep.subr.bf16.mxu0 0
    %2361 = vmatpush2.bf16.msra.mxu0 %v1824
    %2362 = vmatprep.subr.bf16.mxu0 0
    %2363 = vmatpush2.bf16.msra.mxu0 %v1817
    %2364 = vmatprep.subr.bf16.mxu0 0
    %2365 = vmatpush2.bf16.msra.mxu0 %v1810
    %2366 = vmatprep.subr.bf16.mxu0 0
    %2367 = vmatpush2.bf16.msra.mxu0 %v1803
    %2368 = vmatprep.subr.bf16.mxu0 0
    %2369 = vmatpush2.bf16.msra.mxu0 %v1796
    %2370 = vmatprep.subr.bf16.mxu0 0
    %2371 = vmatpush2.bf16.msra.mxu0 %v1789
    %2372 = vmatprep.subr.bf16.mxu0 0
    %2373 = vmatpush2.bf16.msra.mxu0 %v1782
    %2374 = vmatprep.mubr.bf16.mxu0 %v610
    %2375 = vmatmul.mubr.bf16.gmra.mxu0 %v609
    %v2376 = vpop.f32.mrf.mxu0
    %v2377 = vadd.f32 %v2337, %v2376
    %v2378 = vpop.f32.mrf.mxu0
    %v2379 = vpop.f32.mrf.mxu0
    %v2380 = vpop.f32.mrf.mxu0
    %2381 = vdwg.mxu0
    %v2382 = vxor.u32 %v2132, 2147483648
    %v2383 = vxor.u32 %v2134, 2147483648
    %v2384 = vxor.u32 %v2214, 2147483648
    %v2385 = vxor.u32 %v2216, 2147483648
    %v2386 = vxor.u32 %v2296, 2147483648
    %v2387 = vxor.u32 %v2298, 2147483648
    %v2388 = vxor.u32 %v2377, 2147483648
    %v2389 = vmul.f32 %v2382, 1.442695
    %v2390 = vpow.pop %v2389
    %v2391 = vmul.f32 %v2383, 1.442695
    %v2392 = vpow.pop %v2391
    %v2393 = vmul.f32 %v2384, 1.442695
    %v2394 = vpow.pop %v2393
    %v2395 = vmul.f32 %v2385, 1.442695
    %v2396 = vpow.pop %v2395
    %v2397 = vmul.f32 %v2386, 1.442695
    %v2398 = vpow.pop %v2397
    %v2399 = vmul.f32 %v2387, 1.442695
    %v2400 = vpow.pop %v2399
    %v2401 = vmul.f32 %v2388, 1.442695
    %v2402 = vpow.pop %v2401
    %v2403 = vadd.f32 %v2390, 1.0
    %v2404 = vadd.f32 %v2392, 1.0
    %v2405 = vadd.f32 %v2394, 1.0
    %v2406 = vadd.f32 %v2396, 1.0
    %v2407 = vadd.f32 %v2398, 1.0
    %v2408 = vadd.f32 %v2400, 1.0
    %v2409 = vadd.f32 %v2402, 1.0
    %v2410 = vrcp.pop %v2403
    %v2411 = vmul.f32 1.0, %v2410
    %v2412 = vrcp.pop %v2404
    %v2413 = vmul.f32 1.0, %v2412
    %v2414 = vrcp.pop %v2405
    %v2415 = vmul.f32 1.0, %v2414
    %v2416 = vrcp.pop %v2406
    %v2417 = vmul.f32 1.0, %v2416
    %v2418 = vrcp.pop %v2407
    %v2419 = vmul.f32 1.0, %v2418
    %v2420 = vrcp.pop %v2408
    %v2421 = vmul.f32 1.0, %v2420
    %v2422 = vrcp.pop %v2409
    %v2423 = vmul.f32 1.0, %v2422
    %2424 = vst [vmem:[#allocation2] sm:$0xff] %v2411
    %2425 = vst [vmem:[#allocation2 + $0x8] sm:$0xff] %v2413
    %2426 = vst [vmem:[#allocation2 + $0x10] sm:$0xff] %v2415
    %2427 = vst [vmem:[#allocation2 + $0x18] sm:$0xff] %v2417
    %2428 = vst [vmem:[#allocation2 + $0x20] sm:$0xff] %v2419
    %2429 = vst [vmem:[#allocation2 + $0x28] sm:$0xff] %v2421
    %2430 = vst [vmem:[#allocation2 + $0x30] sm:$0xff] %v2423
    // Predicated region
    $region30: #{decoder_forward.1} parent=1 // pred_check
      _
    $region31: #{decoder_forward.1} parent=1 // pred_check_branch
      %2432 = sbr.rel (0) target = $region33
    $region32: #{decoder_forward.1} parent=1 // pred_region
      %s2434 = ssub.s32 896, 896
      %2435 = vsyncadd [#allocation3], %s2434
      %s2437 = sshll.u32 [#allocation2], 4
      %s2438 = int_to_ptr.vmem [resolvable:$true] %s2437
      %2440 = dma.vmem_to_hbm [thread:$0]  %s2438, 896, %s7, [#allocation3]
    $region33: #{decoder_forward.1} parent=1 // pred_fallthru
      _
    // Predicated region
    $region34: #{decoder_forward.1} parent=1 // pred_check
      _
    $region35: #{decoder_forward.1} parent=1 // pred_check_branch
      %2442 = sbr.rel (0) target = $region37
    $region36: #{decoder_forward.1} parent=1 // pred_region
      %2443 = dma.done [#allocation3], 896
    $region37: #{decoder_forward.1} parent=1 // pred_fallthru
      _
    %2444 = vsyncpa [#allocation3], 1

</llo_original>
